<compile_context>
chip_gen: v7x
topology: tpu7x:2x2x1
jax: 0.10.0
libtpu: 0.0.40
codegen_flags: <defaults>
</compile_context>

<pallas_src>
import functools

import jax
import jax.numpy as jnp
from jax.experimental import pallas as pl
from jax.experimental.pallas import tpu as pltpu


# --------------------------------- kernel ------------------------------------

def _rgcn_conv_kernel(a_ref, x_ref, xt_ref, w_ref, b_ref, o_ref, *,
                      num_rel, apply_relu):
    """One node-tile of an RGCNConv layer (all relations folded in).

    a_ref  : [R, TILE_N, N]          bf16  normalized adjacency (count/deg) rows
    x_ref  : [N, F_IN]               bf16  all node features (source side)
    xt_ref : [TILE_N, F_IN]          bf16  this tile's own rows (root term)
    w_ref  : [(R+1)*F_IN, F_OUT]     bf16  stacked [W_0; ...; W_{R-1}; root]
    b_ref  : [1, F_OUT]              f32   bias
    o_ref  : [TILE_N, F_OUT]         bf16/f32 layer output for this node tile
    """
    x = x_ref[...]
    parts = []
    for r in range(num_rel):                       # unrolled (R is small)
        agg = jnp.dot(a_ref[r], x, preferred_element_type=jnp.float32)
        parts.append(agg.astype(x.dtype))          # bf16 for the stacked MXU dot
    parts.append(xt_ref[...])                      # root (self) term
    lhs = jnp.concatenate(parts, axis=-1)          # [TILE_N, (R+1)*F_IN]

    out = jnp.dot(lhs, w_ref[...], preferred_element_type=jnp.float32)
    out = out + b_ref[...]
    if apply_relu:
        out = jnp.maximum(out, 0.0)
    o_ref[...] = out.astype(o_ref.dtype)


def rgcn_conv(x, a_norm, w_stacked, b, *, tile_n, num_rel, apply_relu,
              out_dtype):
    """One RGCNConv layer (mean aggregation + root weight + bias, eval mode)."""
    n, f_in = x.shape
    f_out = w_stacked.shape[-1]
    assert n % tile_n == 0
    assert w_stacked.shape[0] == (num_rel + 1) * f_in

    kernel = functools.partial(_rgcn_conv_kernel, num_rel=num_rel,
                               apply_relu=apply_relu)
    return pl.pallas_call(
        kernel,
        out_shape=jax.ShapeDtypeStruct((n, f_out), out_dtype),
        grid=(n // tile_n,),
        in_specs=[
            pl.BlockSpec((num_rel, tile_n, n), lambda i: (0, i, 0)),    # A_norm rows
            pl.BlockSpec((n, f_in), lambda i: (0, 0)),                  # x (resident)
            pl.BlockSpec((tile_n, f_in), lambda i: (i, 0)),             # x tile (root)
            pl.BlockSpec(((num_rel + 1) * f_in, f_out), lambda i: (0, 0)),  # W stacked
            pl.BlockSpec((1, f_out), lambda i: (0, 0)),                 # bias
        ],
        out_specs=pl.BlockSpec((tile_n, f_out), lambda i: (i, 0)),
        compiler_params=pltpu.CompilerParams(
            dimension_semantics=("parallel",)),
    )(a_norm, x, x, w_stacked, b)


# ------------------------ graph / parameter preprocessing -------------------

def build_rel_adj(src, dst, etype, num_nodes, num_relations):
    """Dense per-relation mean-normalized adjacency A_norm[r,i,j] = cnt/deg (bf16)."""
    cnt = jnp.zeros((num_relations, num_nodes, num_nodes), jnp.float32)
    cnt = cnt.at[etype, dst, src].add(1.0)           # edges j -> i of type r
    deg = jnp.sum(cnt, axis=2, keepdims=True)        # [R, N, 1]
    a_norm = cnt / jnp.maximum(deg, 1.0)             # rows with deg==0 stay 0
    return a_norm.astype(jnp.bfloat16)


def _glorot(key, shape):
    fan_in, fan_out = shape[-2], shape[-1]
    std = (2.0 / (fan_in + fan_out)) ** 0.5
    return std * jax.random.normal(key, shape, jnp.float32)


def build_rgcn(key, in_channels, hidden_channels, num_relations, out_channels,
               num_layers):
    # Replicates RGCN.__init__ channel bookkeeping (default branch, not the
    # ogbl-citation2 GCNConv variant).
    if num_layers == 1:
        dims = [(in_channels, out_channels)]
    else:
        dims = [(in_channels, hidden_channels)]
        dims += [(hidden_channels, hidden_channels)] * (num_layers - 2)
        dims += [(hidden_channels, out_channels)]
    layers = []
    for fi, fo in dims:
        key, k1, k2 = jax.random.split(key, 3)
        w = _glorot(k1, (num_relations, fi, fo))
        root = _glorot(k2, (fi, fo))
        b = jnp.zeros((1, fo), jnp.float32)
        layers.append((w, root, b))
    return layers


def _pad_last(a, multiple):
    pad = (-a.shape[-1]) % multiple
    if pad:
        a = jnp.pad(a, [(0, 0)] * (a.ndim - 1) + [(0, pad)])
    return a


def _stack_weights(w, root, f_in_pad):
    """[W_0; ...; W_{R-1}; root] with the F_in dim zero-padded to f_in_pad, bf16."""
    num_rel, f_in, f_out = w.shape
    pad = f_in_pad - f_in
    assert pad >= 0
    if pad:
        w = jnp.pad(w, ((0, 0), (0, pad), (0, 0)))
        root = jnp.pad(root, ((0, pad), (0, 0)))
    w_stk = jnp.concatenate([w.reshape(num_rel * f_in_pad, f_out), root], axis=0)
    return w_stk.astype(jnp.bfloat16)


def _rgcn_conv_ref_mxu(x, a_norm, w_stacked, b, apply_relu, out_dtype):
    """Pure-JAX mirror of the kernel numerics (bf16 operands, f32 accumulation)."""
    parts = [jnp.dot(a_norm[r], x, preferred_element_type=jnp.float32).astype(x.dtype)
             for r in range(a_norm.shape[0])]
    parts.append(x)
    lhs = jnp.concatenate(parts, axis=-1)
    out = jnp.dot(lhs, w_stacked, preferred_element_type=jnp.float32) + b
    if apply_relu:
        out = jnp.maximum(out, 0.0)
    return out.astype(out_dtype)


def rgcn_forward(x, layers, a_norm, *, tile_n, use_kernel=True):
    # F.dropout is identity in eval mode; ReLU between layers only.
    num_rel = a_norm.shape[0]
    for idx, (w, root, b) in enumerate(layers):
        x = _pad_last(x, 128)                     # lane-dense feature dim
        if x.dtype != jnp.bfloat16:
            x = x.astype(jnp.bfloat16)            # only a real op before layer 0
        last = idx == len(layers) - 1
        f_in_pad = x.shape[-1]
        w_stk = _stack_weights(w, root, f_in_pad)
        out_dtype = jnp.float32 if last else jnp.bfloat16
        if use_kernel:
            x = rgcn_conv(x, a_norm, w_stk, b, tile_n=tile_n, num_rel=num_rel,
                          apply_relu=not last, out_dtype=out_dtype)
        else:
            x = _rgcn_conv_ref_mxu(x, a_norm, w_stk, b, not last, out_dtype)
    return x


# ------------------------------ pure-f32 spec ---------------------------------

def _rgcn_conv_ref_f32(x, w, root, b, src, dst, etype, apply_relu):
    """Exact f32 RGCNConv (mean aggregation + root + bias) from edge lists."""
    n, f_in = x.shape
    num_rel = w.shape[0]
    out = x @ root + b
    for r in range(num_rel):
        sel = (etype == r).astype(jnp.float32)
        summed = jnp.zeros((n, f_in), jnp.float32).at[dst].add(sel[:, None] * x[src])
        cnt = jnp.zeros((n,), jnp.float32).at[dst].add(sel)
        mean = summed / jnp.maximum(cnt, 1.0)[:, None]
        out = out + mean @ w[r]
    return jnp.maximum(out, 0.0) if apply_relu else out


# --------------------------------- driver ------------------------------------

if __name__ == "__main__":
    N, F_IN, HIDDEN, OUT_C = 256, 64, 128, 128
    R, E, NUM_LAYERS, TILE_N = 4, 2048, 2, 128

    key = jax.random.PRNGKey(0)
    k_x, k_src, k_dst, k_rel, k_par = jax.random.split(key, 5)
    x = jax.random.normal(k_x, (N, F_IN), jnp.float32)
    src = jax.random.randint(k_src, (E,), 0, N)      # edge_index[0]
    dst = jax.random.randint(k_dst, (E,), 0, N)      # edge_index[1]
    etype = jax.random.randint(k_rel, (E,), 0, R)    # edge_types

    a_norm = build_rel_adj(src, dst, etype, N, R)
    layers = build_rgcn(k_par, F_IN, HIDDEN, R, OUT_C, NUM_LAYERS)

    y = rgcn_forward(x, layers, a_norm, tile_n=TILE_N)
    y = jax.block_until_ready(y)
    assert y.shape == (N, OUT_C)
    assert y.dtype == jnp.float32

    # (a) tight check against a JAX reference that mirrors the kernel numerics
    #     (same bf16 operands / normalized adjacency, f32 accumulation).
    y_mxu = rgcn_forward(x, layers, a_norm, tile_n=TILE_N, use_kernel=False)
    err_mxu = float(jnp.max(jnp.abs(y - y_mxu)))
    assert err_mxu < 2e-2, f"kernel vs bf16-MXU reference mismatch: {err_mxu}"

    # (b) sanity check against the pure-f32 RGCNConv spec; remaining gap is
    #     only bf16 operand rounding (accumulation stays f32).
    x_r = x
    for idx, (w, root, b) in enumerate(layers):
        x_r = _rgcn_conv_ref_f32(x_r, w, root, b, src, dst, etype,
                                 idx < len(layers) - 1)
    err_spec = float(jnp.max(jnp.abs(y - x_r)))
    assert err_spec < 0.25, f"kernel vs f32 spec deviates too much: {err_spec}"

    print("KERNEL_OK")
</pallas_src>

<mosaic_0001>
module attributes {stable_mosaic.version = 11 : i64} {
  func.func @_rgcn_conv_kernel(%arg0: i32, %arg1: memref<4x128x256xbf16, #tpu.memory_space<vmem>>, %arg2: memref<256x128xbf16, #tpu.memory_space<vmem>>, %arg3: memref<128x128xbf16, #tpu.memory_space<vmem>>, %arg4: memref<640x128xbf16, #tpu.memory_space<vmem>>, %arg5: memref<1x128xf32, #tpu.memory_space<vmem>>, %arg6: memref<128x128xbf16, #tpu.memory_space<vmem>>) attributes {dimension_semantics = [#tpu.dimension_semantics<parallel>], iteration_bounds = array<i64: 2>, scalar_prefetch = 0 : i64, scratch_operands = 0 : i64, tpu.core_type = #tpu.core_type<tc>, window_params = [{transform_indices = @transform_0, window_bounds = array<i64: 4, 128, 256>}, {pipeline_mode = #tpu.pipeline_mode<synchronous>, transform_indices = @transform_1, window_bounds = array<i64: 256, 128>}, {transform_indices = @transform_2, window_bounds = array<i64: 128, 128>}, {pipeline_mode = #tpu.pipeline_mode<synchronous>, transform_indices = @transform_3, window_bounds = array<i64: 640, 128>}, {pipeline_mode = #tpu.pipeline_mode<synchronous>, transform_indices = @transform_4, window_bounds = array<i64: 1, 128>}, {transform_indices = @transform_5, window_bounds = array<i64: 128, 128>}]} {
    %c0 = arith.constant 0 : index
    %c0_0 = arith.constant 0 : index
    %0 = vector.load %arg2[%c0, %c0_0] : memref<256x128xbf16, #tpu.memory_space<vmem>>, vector<256x128xbf16>
    %c0_1 = arith.constant 0 : index
    %c0_2 = arith.constant 0 : index
    %c0_3 = arith.constant 0 : index
    %1 = vector.load %arg1[%c0_1, %c0_2, %c0_3] : memref<4x128x256xbf16, #tpu.memory_space<vmem>>, vector<1x128x256xbf16>
    %2 = vector.shape_cast %1 : vector<1x128x256xbf16> to vector<128x256xbf16>
    %cst = arith.constant dense<0.000000e+00> : vector<128x128xf32>
    %3 = tpu.matmul %2, %0, %cst {dimension_numbers = #tpu.dot_dimension_numbers<[1], [0], [0], [1], [0, 0, 1, 1], [], []>} : vector<128x256xbf16>, vector<256x128xbf16>, vector<128x128xf32> -> vector<128x128xf32>
    %4 = arith.truncf %3 : vector<128x128xf32> to vector<128x128xbf16>
    %c1 = arith.constant 1 : index
    %c0_4 = arith.constant 0 : index
    %c0_5 = arith.constant 0 : index
    %5 = vector.load %arg1[%c1, %c0_4, %c0_5] : memref<4x128x256xbf16, #tpu.memory_space<vmem>>, vector<1x128x256xbf16>
    %6 = vector.shape_cast %5 : vector<1x128x256xbf16> to vector<128x256xbf16>
    %cst_6 = arith.constant dense<0.000000e+00> : vector<128x128xf32>
    %7 = tpu.matmul %6, %0, %cst_6 {dimension_numbers = #tpu.dot_dimension_numbers<[1], [0], [0], [1], [0, 0, 1, 1], [], []>} : vector<128x256xbf16>, vector<256x128xbf16>, vector<128x128xf32> -> vector<128x128xf32>
    %8 = arith.truncf %7 : vector<128x128xf32> to vector<128x128xbf16>
    %c2 = arith.constant 2 : index
    %c0_7 = arith.constant 0 : index
    %c0_8 = arith.constant 0 : index
    %9 = vector.load %arg1[%c2, %c0_7, %c0_8] : memref<4x128x256xbf16, #tpu.memory_space<vmem>>, vector<1x128x256xbf16>
    %10 = vector.shape_cast %9 : vector<1x128x256xbf16> to vector<128x256xbf16>
    %cst_9 = arith.constant dense<0.000000e+00> : vector<128x128xf32>
    %11 = tpu.matmul %10, %0, %cst_9 {dimension_numbers = #tpu.dot_dimension_numbers<[1], [0], [0], [1], [0, 0, 1, 1], [], []>} : vector<128x256xbf16>, vector<256x128xbf16>, vector<128x128xf32> -> vector<128x128xf32>
    %12 = arith.truncf %11 : vector<128x128xf32> to vector<128x128xbf16>
    %c3 = arith.constant 3 : index
    %c0_10 = arith.constant 0 : index
    %c0_11 = arith.constant 0 : index
    %13 = vector.load %arg1[%c3, %c0_10, %c0_11] : memref<4x128x256xbf16, #tpu.memory_space<vmem>>, vector<1x128x256xbf16>
    %14 = vector.shape_cast %13 : vector<1x128x256xbf16> to vector<128x256xbf16>
    %cst_12 = arith.constant dense<0.000000e+00> : vector<128x128xf32>
    %15 = tpu.matmul %14, %0, %cst_12 {dimension_numbers = #tpu.dot_dimension_numbers<[1], [0], [0], [1], [0, 0, 1, 1], [], []>} : vector<128x256xbf16>, vector<256x128xbf16>, vector<128x128xf32> -> vector<128x128xf32>
    %16 = arith.truncf %15 : vector<128x128xf32> to vector<128x128xbf16>
    %c0_13 = arith.constant 0 : index
    %c0_14 = arith.constant 0 : index
    %17 = vector.load %arg3[%c0_13, %c0_14] : memref<128x128xbf16, #tpu.memory_space<vmem>>, vector<128x128xbf16>
    %18 = tpu.concatenate %4, %8, %12, %16, %17 in 1 : vector<128x128xbf16>, vector<128x128xbf16>, vector<128x128xbf16>, vector<128x128xbf16>, vector<128x128xbf16> -> vector<128x640xbf16>
    %c0_15 = arith.constant 0 : index
    %c0_16 = arith.constant 0 : index
    %19 = vector.load %arg4[%c0_15, %c0_16] : memref<640x128xbf16, #tpu.memory_space<vmem>>, vector<640x128xbf16>
    %cst_17 = arith.constant dense<0.000000e+00> : vector<128x128xf32>
    %20 = tpu.matmul %18, %19, %cst_17 {dimension_numbers = #tpu.dot_dimension_numbers<[1], [0], [0], [1], [0, 0, 1, 1], [], []>} : vector<128x640xbf16>, vector<640x128xbf16>, vector<128x128xf32> -> vector<128x128xf32>
    %c0_18 = arith.constant 0 : index
    %c0_19 = arith.constant 0 : index
    %21 = vector.load %arg5[%c0_18, %c0_19] : memref<1x128xf32, #tpu.memory_space<vmem>>, vector<1x128xf32>
    %22 = vector.broadcast %21 : vector<1x128xf32> to vector<128x128xf32>
    %23 = arith.addf %20, %22 : vector<128x128xf32>
    %cst_20 = arith.constant 0.000000e+00 : f32
    %24 = vector.broadcast %cst_20 : f32 to vector<128x128xf32>
    %25 = arith.maximumf %23, %24 : vector<128x128xf32>
    %26 = arith.truncf %25 : vector<128x128xf32> to vector<128x128xbf16>
    %c0_21 = arith.constant 0 : index
    %c0_22 = arith.constant 0 : index
    %27 = vector.load %arg6[%c0_21, %c0_22] : memref<128x128xbf16, #tpu.memory_space<vmem>>, vector<128x128xbf16>
    tpu.vector_store %arg6[%c0_21, %c0_22], %26 {strides = array<i32>} : memref<128x128xbf16, #tpu.memory_space<vmem>>, vector<128x128xbf16>,
    return
  }
  func.func @transform_0(%arg0: i32) -> (i32, i32, i32) {
    %c0_i32 = arith.constant 0 : i32
    %c0_i32_0 = arith.constant 0 : i32
    %c0_i32_1 = arith.constant 0 : i32
    return %c0_i32, %arg0, %c0_i32_0 : i32, i32, i32
  }
  func.func @transform_1(%arg0: i32) -> (i32, i32) {
    %c0_i32 = arith.constant 0 : i32
    %c0_i32_0 = arith.constant 0 : i32
    %c0_i32_1 = arith.constant 0 : i32
    return %c0_i32, %c0_i32_0 : i32, i32
  }
  func.func @transform_2(%arg0: i32) -> (i32, i32) {
    %c0_i32 = arith.constant 0 : i32
    %c0_i32_0 = arith.constant 0 : i32
    return %arg0, %c0_i32 : i32, i32
  }
  func.func @transform_3(%arg0: i32) -> (i32, i32) {
    %c0_i32 = arith.constant 0 : i32
    %c0_i32_0 = arith.constant 0 : i32
    %c0_i32_1 = arith.constant 0 : i32
    return %c0_i32, %c0_i32_0 : i32, i32
  }
  func.func @transform_4(%arg0: i32) -> (i32, i32) {
    %c0_i32 = arith.constant 0 : i32
    %c0_i32_0 = arith.constant 0 : i32
    %c0_i32_1 = arith.constant 0 : i32
    return %c0_i32, %c0_i32_0 : i32, i32
  }
  func.func @transform_5(%arg0: i32) -> (i32, i32) {
    %c0_i32 = arith.constant 0 : i32
    %c0_i32_0 = arith.constant 0 : i32
    return %arg0, %c0_i32 : i32, i32
  }
}

</mosaic_0001>

<llo_original>
// kernel: tpu_custom_call.1
$region0: #{tpu_custom_call.1}
  #allocation0 [shape = 'u32[]', space=smem, size = 0x4, offset = 0x4, fixed_abs, tag = 'smem constant byte address 0x4 - core index']
  #allocation1 [shape = 'u32[144,128]{1,0:T(1,128)}', space=vmem, size = 0x12000, scoped, tag = 'internal scratch']
  #allocation10 [shape = 's32[]', space=sflag, size = 0x4, offset = 0, fixed_abs, tag = 'sflag constant byte address 0x0 - dummy sync flag']
  %s0 = inlined_call_operand.hbm [shape: bf16[4,256,256], index: 0, kind: input, shape index: {}]
  %s1 = inlined_call_operand.hbm [shape: bf16[256,128], index: 1, kind: input, shape index: {}]
  %s2 = inlined_call_operand.hbm [shape: bf16[256,128], index: 2, kind: input, shape index: {}]
  %s3 = inlined_call_operand.hbm [shape: bf16[640,128], index: 3, kind: input, shape index: {}]
  %s4 = inlined_call_operand.vmem [shape: f32[1,128], index: 4, kind: input, shape index: {}]
  %s5 = inlined_call_operand.hbm [shape: bf16[256,128], index: 5, kind: output, shape index: {}]
  %s6 = sld [smem:[#allocation0]]
  $region69: #{tpu_custom_call.1} parent=0
    _
  %s8 = ssub.s32 1, %s6
  %s9 = scalar_select 0, %s8, %s6
  $region1: #{tpu_custom_call.1} parent=0
    #allocation2 [shape = 'u8[524288]{0}', space=vmem, size = 0x80000, scoped, tag = 'input window, operand 0']
    #allocation3 [shape = 's32[2]{0}', space=sflag, size = 0x8, scoped, tag = 'scoped memory for tpu_custom_call.1']
    #allocation4 [shape = 's32[2]{0}', space=sflag, size = 0x8, scoped, tag = 'scoped memory for tpu_custom_call.1']
    #allocation5 [shape = 'u8[65536]{0}', space=vmem, size = 0x10000, scoped, tag = 'input window, operand 1, single buffered']
    #allocation6 [shape = 's32[1]{0}', space=sflag, size = 0x4, scoped, tag = 'scoped memory for tpu_custom_call.1']
    #allocation7 [shape = 'u8[65536]{0}', space=vmem, size = 0x10000, scoped, tag = 'input window, operand 2']
    #allocation8 [shape = 'u8[163840]{0}', space=vmem, size = 0x28000, scoped, tag = 'input window, operand 3, single buffered']
    #allocation9 [shape = 'u8[65536]{0}', space=vmem, size = 0x10000, scoped, tag = 'output window, operand 0']
    %10 = vsyncpa [#allocation3], 0
    %s11 = scalar_lea.sflag [#allocation3], 1
    %12 = vsyncpa %s11, 0
    %13 = vsyncpa [#allocation6], 0
    %14 = vsyncpa [#allocation4], 0
    %s15 = scalar_lea.sflag [#allocation4], 1
    %16 = vsyncpa %s15, 0
    loop: start=0, step=1, limit=4
    $region2: #{tpu_custom_call.1} parent=1 // loop_pre_header
      _
    $region3: #{tpu_custom_call.1} parent=1 // loop_header
      %s18 = sphi 0, %s22
      %p19 = scmp.ge.s32.totalorder %s18, 4
      %s28 = sphi 0, %s30
      %s31 = sphi 0, %s28
      %s32 = sphi 0, %s31
      %s48 = sphi 0, %s32
      %s52 = sphi 0, %s52
      %s54 = sphi 0, %s52
      %s55 = sphi 0, %s54
      %s69 = sphi 0, %s55
      %s75 = sphi 0, %s77
      %s78 = sphi 0, %s75
      %s79 = sphi 0, %s78
      %s95 = sphi 0, %s79
      %s99 = sphi 0, %s99
      %s101 = sphi 0, %s99
      %s102 = sphi 0, %s101
      %s116 = sphi 0, %s102
      %s120 = sphi 0, %s120
      %s122 = sphi 0, %s120
      %s123 = sphi 0, %s122
      %s137 = sphi 0, %s123
      %s143 = sphi 0, %s145
      %s146 = sphi 0, %s143
      %s147 = sphi 0, %s146
      %s163 = sphi 0, %s147
    $region4: #{tpu_custom_call.1} parent=1 // loop_header_branch
      %21 = sbr.rel (%p19) target = $region8
    $region5: #{tpu_custom_call.1} parent=1 // loop_body
      %s23 = ssub.s32 %s18, 1
      %s24 = ssub.s32 %s18, 2
      %s25 = sadd.s32 %s18, 1
      %s26 = ssub.s32 %s18, %s25
      %p27 = scmp.eq.s32.totalorder %s26, 0
      %s29 = sadd.s32 %s28, 1
      %s30 = scalar_select %p27, %s28, %s29
      %p33 = pneg %p27
      %p34 = scmp.eq.s32.totalorder %s18, 1
      %p35 = por %p33, %p34
      %p36 = scmp.ne.s32.totalorder %s28, %s31
      %p37 = scmp.eq.s32.totalorder %s18, 0
      %p38 = por %p36, %p37
      %p39 = scmp.ne.s32.totalorder %s28, %s31
      %p40 = scmp.eq.s32.totalorder %s23, 1
      %p41 = por %p39, %p40
      %p42 = scmp.ne.s32.totalorder %s31, %s32
      %p43 = scmp.eq.s32.totalorder %s23, 0
      %p44 = por %p42, %p43
      %p45 = scmp.ne.s32.totalorder %s31, %s32
      %p46 = scmp.eq.s32.totalorder %s24, 1
      %p47 = por %p45, %p46
      %p49 = scmp.ne.s32.totalorder %s32, %s48
      %p50 = scmp.eq.s32.totalorder %s24, 0
      %p51 = por %p49, %p50
      %s53 = sadd.s32 %s52, 1
      %p56 = scmp.eq.s32.totalorder %s18, 1
      %p57 = scmp.ne.s32.totalorder %s52, %s54
      %p58 = scmp.eq.s32.totalorder %s18, 0
      %p59 = por %p57, %p58
      %p60 = scmp.ne.s32.totalorder %s52, %s54
      %p61 = scmp.eq.s32.totalorder %s23, 1
      %p62 = por %p60, %p61
      %p63 = scmp.ne.s32.totalorder %s54, %s55
      %p64 = scmp.eq.s32.totalorder %s23, 0
      %p65 = por %p63, %p64
      %p66 = scmp.ne.s32.totalorder %s54, %s55
      %p67 = scmp.eq.s32.totalorder %s24, 1
      %p68 = por %p66, %p67
      %p70 = scmp.ne.s32.totalorder %s55, %s69
      %p71 = scmp.eq.s32.totalorder %s24, 0
      %p72 = por %p70, %p71
      %s73 = ssub.s32 %s18, %s25
      %p74 = scmp.eq.s32.totalorder %s73, 0
      %s76 = sadd.s32 %s75, 1
      %s77 = scalar_select %p74, %s75, %s76
      %p80 = pneg %p74
      %p81 = scmp.eq.s32.totalorder %s18, 1
      %p82 = por %p80, %p81
      %p83 = scmp.ne.s32.totalorder %s75, %s78
      %p84 = scmp.eq.s32.totalorder %s18, 0
      %p85 = por %p83, %p84
      %p86 = scmp.ne.s32.totalorder %s75, %s78
      %p87 = scmp.eq.s32.totalorder %s23, 1
      %p88 = por %p86, %p87
      %p89 = scmp.ne.s32.totalorder %s78, %s79
      %p90 = scmp.eq.s32.totalorder %s23, 0
      %p91 = por %p89, %p90
      %p92 = scmp.ne.s32.totalorder %s78, %s79
      %p93 = scmp.eq.s32.totalorder %s24, 1
      %p94 = por %p92, %p93
      %p96 = scmp.ne.s32.totalorder %s79, %s95
      %p97 = scmp.eq.s32.totalorder %s24, 0
      %p98 = por %p96, %p97
      %s100 = sadd.s32 %s99, 1
      %p103 = scmp.eq.s32.totalorder %s18, 1
      %p104 = scmp.ne.s32.totalorder %s99, %s101
      %p105 = scmp.eq.s32.totalorder %s18, 0
      %p106 = por %p104, %p105
      %p107 = scmp.ne.s32.totalorder %s99, %s101
      %p108 = scmp.eq.s32.totalorder %s23, 1
      %p109 = por %p107, %p108
      %p110 = scmp.ne.s32.totalorder %s101, %s102
      %p111 = scmp.eq.s32.totalorder %s23, 0
      %p112 = por %p110, %p111
      %p113 = scmp.ne.s32.totalorder %s101, %s102
      %p114 = scmp.eq.s32.totalorder %s24, 1
      %p115 = por %p113, %p114
      %p117 = scmp.ne.s32.totalorder %s102, %s116
      %p118 = scmp.eq.s32.totalorder %s24, 0
      %p119 = por %p117, %p118
      %s121 = sadd.s32 %s120, 1
      %p124 = scmp.eq.s32.totalorder %s18, 1
      %p125 = scmp.ne.s32.totalorder %s120, %s122
      %p126 = scmp.eq.s32.totalorder %s18, 0
      %p127 = por %p125, %p126
      %p128 = scmp.ne.s32.totalorder %s120, %s122
      %p129 = scmp.eq.s32.totalorder %s23, 1
      %p130 = por %p128, %p129
      %p131 = scmp.ne.s32.totalorder %s122, %s123
      %p132 = scmp.eq.s32.totalorder %s23, 0
      %p133 = por %p131, %p132
      %p134 = scmp.ne.s32.totalorder %s122, %s123
      %p135 = scmp.eq.s32.totalorder %s24, 1
      %p136 = por %p134, %p135
      %p138 = scmp.ne.s32.totalorder %s123, %s137
      %p139 = scmp.eq.s32.totalorder %s24, 0
      %p140 = por %p138, %p139
      %s141 = ssub.s32 %s18, %s25
      %p142 = scmp.eq.s32.totalorder %s141, 0
      %s144 = sadd.s32 %s143, 1
      %s145 = scalar_select %p142, %s143, %s144
      %p148 = pneg %p142
      %p149 = scmp.eq.s32.totalorder %s18, 1
      %p150 = por %p148, %p149
      %p151 = scmp.ne.s32.totalorder %s143, %s146
      %p152 = scmp.eq.s32.totalorder %s18, 0
      %p153 = por %p151, %p152
      %p154 = scmp.ne.s32.totalorder %s143, %s146
      %p155 = scmp.eq.s32.totalorder %s23, 1
      %p156 = por %p154, %p155
      %p157 = scmp.ne.s32.totalorder %s146, %s147
      %p158 = scmp.eq.s32.totalorder %s23, 0
      %p159 = por %p157, %p158
      %p160 = scmp.ne.s32.totalorder %s146, %s147
      %p161 = scmp.eq.s32.totalorder %s24, 1
      %p162 = por %p160, %p161
      %p164 = scmp.ne.s32.totalorder %s147, %s163
      %p165 = scmp.eq.s32.totalorder %s24, 0
      %p166 = por %p164, %p165
      %p167 = scmp.le.s32.totalorder 1, %s18
      %p168 = scmp.lt.s32.totalorder %s18, 3
      %p169 = pnand %p167, %p168
      %p170 = pneg %p169
      // Predicated region
      $region9: #{tpu_custom_call.1} parent=5 // pred_check
        _
      $region10: #{tpu_custom_call.1} parent=5 // pred_check_branch
        %172 = sbr.rel (%p169) target = $region12
      $region11: #{tpu_custom_call.1} parent=5 // pred_region
        %s173 = ssub.s32 %s18, 1
        // Predicated region
        $region13: #{tpu_custom_call.1} parent=11 // pred_check
          %p174 = pneg %p65
        $region14: #{tpu_custom_call.1} parent=11 // pred_check_branch
          %176 = sbr.rel (%p174) target = $region16
        $region15: #{tpu_custom_call.1} parent=11 // pred_region
          %s178 = ssub.s32 2048, 2048
          %179 = vsyncadd [#allocation6], %s178
          %s180 = sshll.u32 [#allocation5], 4
          %s181 = int_to_ptr.vmem [resolvable:$true] %s180
          %186 = dma.hbm_to_vmem [thread:$0]  %s1, 2048, %s181, [#allocation6], 64, 64, 4
        $region16: #{tpu_custom_call.1} parent=11 // pred_fallthru
          _
        // Predicated region
        $region17: #{tpu_custom_call.1} parent=11 // pred_check
          %p187 = pneg %p112
        $region18: #{tpu_custom_call.1} parent=11 // pred_check_branch
          %189 = sbr.rel (%p187) target = $region20
        $region19: #{tpu_custom_call.1} parent=11 // pred_region
          %s191 = ssub.s32 5120, 5120
          %192 = vsyncadd [#allocation6], %s191
          %s193 = sshll.u32 [#allocation8], 4
          %s194 = int_to_ptr.vmem [resolvable:$true] %s193
          %199 = dma.hbm_to_vmem [thread:$0]  %s3, 5120, %s194, [#allocation6], 64, 64, 4
        $region20: #{tpu_custom_call.1} parent=11 // pred_fallthru
          _
        // Predicated region
        $region21: #{tpu_custom_call.1} parent=11 // pred_check
          %p200 = pneg %p133
        $region22: #{tpu_custom_call.1} parent=11 // pred_check_branch
          %202 = sbr.rel (%p200) target = $region24
        $region23: #{tpu_custom_call.1} parent=11 // pred_region
          _
        $region24: #{tpu_custom_call.1} parent=11 // pred_fallthru
          _
      $region12: #{tpu_custom_call.1} parent=5 // pred_fallthru
        _
      %p203 = scmp.lt.s32.totalorder %s18, 2
      // Predicated region
      $region25: #{tpu_custom_call.1} parent=5 // pred_check
        %p204 = pneg %p203
      $region26: #{tpu_custom_call.1} parent=5 // pred_check_branch
        %206 = sbr.rel (%p204) target = $region28
      $region27: #{tpu_custom_call.1} parent=5 // pred_region
        // Predicated region
        $region29: #{tpu_custom_call.1} parent=27 // pred_check
          %p207 = pneg %p38
        $region30: #{tpu_custom_call.1} parent=27 // pred_check_branch
          %209 = sbr.rel (%p207) target = $region32
        $region31: #{tpu_custom_call.1} parent=27 // pred_region
          #allocation11 [shape = 'u32[6]{0}', space=smem, size = 0x18, scoped, tag = 'DMA stride descriptor']
          %s210 = sand.u32 %s18, 1
          %s211 = scalar_lea.sflag [#allocation3], %s210
          %s212 = sand.u32 %s28, 1
          %s213 = smul.addr %s212, 512
          %s214 = scalar_lea.vmem [#allocation2], %s213
          %s215 = smul.u32 16, %s18
          %s217 = ssub.s32 8192, 8192
          %218 = vsyncadd %s211, %s217
          %s219 = smul.addr %s215, 2
          %s220 = smul.addr %s219, 64
          %s221 = scalar_lea.hbm %s0, %s220
          %s223 = sshll.u32 1, 14
          %s224 = sxor.u32 4294967295, %s223
          %s226 = sld [smem:[#allocation0]]
          %s227 = sadd.s32 2, %s226
          %s229 = sshll.u32 7, 26
          %s230 = sxor.u32 4294967295, %s229
          %s231 = sand.u32 0, %s230
          %s232 = sshll.u32 %s227, 26
          %s233 = sor.u32 %s231, %s232
          %s234 = sshll.u32 %s214, 4
          %s235 = int_to_ptr.vmem [resolvable:$true] %s234
          %241 = sst [smem:[#allocation11]] 4096
          %s242 = scalar_lea.smem [#allocation11], 1
          %243 = sst [smem:[%s242]] 2048
          %s244 = scalar_lea.smem [#allocation11], 2
          %245 = sst [smem:[%s244]] 16
          %s246 = scalar_lea.smem [#allocation11], 3
          %247 = sst [smem:[%s246]] 128
          %s248 = scalar_lea.smem [#allocation11], 4
          %249 = sst [smem:[%s248]] 128
          %s250 = scalar_lea.smem [#allocation11], 5
          %251 = sst [smem:[%s250]] 8
          %253 = dma.general %s221, 8192, %s235, %s211, [#allocation10], [#allocation11], %s233, 0
        $region32: #{tpu_custom_call.1} parent=27 // pred_fallthru
          _
        // Predicated region
        $region33: #{tpu_custom_call.1} parent=27 // pred_check
          %p254 = pneg %p85
        $region34: #{tpu_custom_call.1} parent=27 // pred_check_branch
          %256 = sbr.rel (%p254) target = $region36
        $region35: #{tpu_custom_call.1} parent=27 // pred_region
          %s257 = sand.u32 %s18, 1
          %s258 = scalar_lea.sflag [#allocation3], %s257
          %s259 = sand.u32 %s75, 1
          %s260 = smul.addr %s259, 64
          %s261 = scalar_lea.vmem [#allocation7], %s260
          %s262 = smul.u32 16, %s18
          %s264 = ssub.s32 1024, 1024
          %265 = vsyncadd %s258, %s264
          %s266 = smul.addr %s262, 64
          %s267 = scalar_lea.hbm %s2, %s266
          %s268 = sshll.u32 %s261, 4
          %s269 = int_to_ptr.vmem [resolvable:$true] %s268
          %274 = dma.hbm_to_vmem [thread:$0]  %s267, 1024, %s269, %s258, 64, 64, 4
        $region36: #{tpu_custom_call.1} parent=27 // pred_fallthru
          _
      $region28: #{tpu_custom_call.1} parent=5 // pred_fallthru
        _
      %p275 = scmp.le.s32.totalorder 1, %s18
      %p276 = scmp.lt.s32.totalorder %s18, 3
      %p277 = pnand %p275, %p276
      %p278 = pneg %p277
      // Predicated region
      $region37: #{tpu_custom_call.1} parent=5 // pred_check
        _
      $region38: #{tpu_custom_call.1} parent=5 // pred_check_branch
        %280 = sbr.rel (%p277) target = $region40
      $region39: #{tpu_custom_call.1} parent=5 // pred_region
        %s281 = ssub.s32 %s18, 1
        %s282 = sand.u32 %s23, 1
        %s283 = scalar_lea.sflag [#allocation3], %s282
        %s284 = sand.u32 %s31, 1
        %s285 = smul.addr %s284, 512
        %s286 = scalar_lea.vmem [#allocation2], %s285
        // Predicated region
        $region41: #{tpu_custom_call.1} parent=39 // pred_check
          %p287 = pneg %p44
        $region42: #{tpu_custom_call.1} parent=39 // pred_check_branch
          %289 = sbr.rel (%p287) target = $region44
        $region43: #{tpu_custom_call.1} parent=39 // pred_region
          %290 = dma.done %s283, 8192
        $region44: #{tpu_custom_call.1} parent=39 // pred_fallthru
          _
        // Predicated region
        $region45: #{tpu_custom_call.1} parent=39 // pred_check
          %p291 = pneg %p65
        $region46: #{tpu_custom_call.1} parent=39 // pred_check_branch
          %293 = sbr.rel (%p291) target = $region48
        $region47: #{tpu_custom_call.1} parent=39 // pred_region
          %294 = dma.done [#allocation6], 2048
        $region48: #{tpu_custom_call.1} parent=39 // pred_fallthru
          _
        %s295 = sand.u32 %s23, 1
        %s296 = scalar_lea.sflag [#allocation3], %s295
        %s297 = sand.u32 %s78, 1
        %s298 = smul.addr %s297, 64
        %s299 = scalar_lea.vmem [#allocation7], %s298
        // Predicated region
        $region49: #{tpu_custom_call.1} parent=39 // pred_check
          %p300 = pneg %p91
        $region50: #{tpu_custom_call.1} parent=39 // pred_check_branch
          %302 = sbr.rel (%p300) target = $region52
        $region51: #{tpu_custom_call.1} parent=39 // pred_region
          %303 = dma.done %s296, 1024
        $region52: #{tpu_custom_call.1} parent=39 // pred_fallthru
          _
        // Predicated region
        $region53: #{tpu_custom_call.1} parent=39 // pred_check
          %p304 = pneg %p112
        $region54: #{tpu_custom_call.1} parent=39 // pred_check_branch
          %306 = sbr.rel (%p304) target = $region56
        $region55: #{tpu_custom_call.1} parent=39 // pred_region
          %307 = dma.done [#allocation6], 5120
        $region56: #{tpu_custom_call.1} parent=39 // pred_fallthru
          _
        %s308 = sand.u32 %s23, 1
        %s309 = scalar_lea.sflag [#allocation3], %s308
        %s310 = sand.u32 %s31, 1
        %s311 = smul.addr %s310, 512
        %s312 = scalar_lea.vmem [#allocation2], %s311
        %p313 = pneg %p44
        %p314 = pneg %p41
        %p315 = pneg %p65
        %p316 = pneg %p62
        %s317 = sand.u32 %s23, 1
        %s318 = scalar_lea.sflag [#allocation3], %s317
        %s319 = sand.u32 %s78, 1
        %s320 = smul.addr %s319, 64
        %s321 = scalar_lea.vmem [#allocation7], %s320
        %p322 = pneg %p91
        %p323 = pneg %p88
        %p324 = pneg %p112
        %p325 = pneg %p109
        %p326 = pneg %p133
        %p327 = pneg %p130
        %p328 = pneg %p159
        %p329 = pneg %p156
        %s330 = sand.u32 %s146, 1
        %s331 = scalar_lea.sflag [#allocation4], %s330
        %s332 = sand.u32 %s146, 1
        %s333 = smul.addr %s332, 64
        %s334 = scalar_lea.vmem [#allocation9], %s333
        %s335 = smul.u32 16, %s23
        %s336 = smul.u32 16, %s23
        %s337 = smul.u32 16, %s23
        %v339 = vld [vmem:[#allocation5] sm:$0xf]
        %v340 = vld [vmem:[#allocation5 + $0x4] sm:$0xf]
        %v341 = vld [vmem:[#allocation5 + $0x8] sm:$0xf]
        %v342 = vld [vmem:[#allocation5 + $0xc] sm:$0xf]
        %v343 = vld [vmem:[#allocation5 + $0x10] sm:$0xf]
        %v344 = vld [vmem:[#allocation5 + $0x14] sm:$0xf]
        %v345 = vld [vmem:[#allocation5 + $0x18] sm:$0xf]
        %v346 = vld [vmem:[#allocation5 + $0x1c] sm:$0xf]
        %v347 = vld [vmem:[#allocation5 + $0x20] sm:$0xf]
        %v348 = vld [vmem:[#allocation5 + $0x24] sm:$0xf]
        %v349 = vld [vmem:[#allocation5 + $0x28] sm:$0xf]
        %v350 = vld [vmem:[#allocation5 + $0x2c] sm:$0xf]
        %v351 = vld [vmem:[#allocation5 + $0x30] sm:$0xf]
        %v352 = vld [vmem:[#allocation5 + $0x34] sm:$0xf]
        %v353 = vld [vmem:[#allocation5 + $0x38] sm:$0xf]
        %v354 = vld [vmem:[#allocation5 + $0x3c] sm:$0xf]
        %v355 = vld [vmem:[#allocation5 + $0x40] sm:$0xf]
        %v356 = vld [vmem:[#allocation5 + $0x44] sm:$0xf]
        %v357 = vld [vmem:[#allocation5 + $0x48] sm:$0xf]
        %v358 = vld [vmem:[#allocation5 + $0x4c] sm:$0xf]
        %v359 = vld [vmem:[#allocation5 + $0x50] sm:$0xf]
        %v360 = vld [vmem:[#allocation5 + $0x54] sm:$0xf]
        %v361 = vld [vmem:[#allocation5 + $0x58] sm:$0xf]
        %v362 = vld [vmem:[#allocation5 + $0x5c] sm:$0xf]
        %v363 = vld [vmem:[#allocation5 + $0x60] sm:$0xf]
        %v364 = vld [vmem:[#allocation5 + $0x64] sm:$0xf]
        %v365 = vld [vmem:[#allocation5 + $0x68] sm:$0xf]
        %v366 = vld [vmem:[#allocation5 + $0x6c] sm:$0xf]
        %v367 = vld [vmem:[#allocation5 + $0x70] sm:$0xf]
        %v368 = vld [vmem:[#allocation5 + $0x74] sm:$0xf]
        %v369 = vld [vmem:[#allocation5 + $0x78] sm:$0xf]
        %v370 = vld [vmem:[#allocation5 + $0x7c] sm:$0xf]
        %v371 = vld [vmem:[%s286] sm:$0xff]
        %v372 = vld [vmem:[%s286 + $0x8] sm:$0xff]
        %v373 = vld [vmem:[%s286 + $0x10] sm:$0xff]
        %v374 = vld [vmem:[%s286 + $0x18] sm:$0xff]
        %v375 = vld [vmem:[%s286 + $0x20] sm:$0xff]
        %v376 = vld [vmem:[%s286 + $0x28] sm:$0xff]
        %v377 = vld [vmem:[%s286 + $0x30] sm:$0xff]
        %v378 = vld [vmem:[%s286 + $0x38] sm:$0xff]
        %v379 = vld [vmem:[%s286 + $0x40] sm:$0xff]
        %v380 = vld [vmem:[%s286 + $0x48] sm:$0xff]
        %v381 = vld [vmem:[%s286 + $0x50] sm:$0xff]
        %v382 = vld [vmem:[%s286 + $0x58] sm:$0xff]
        %v383 = vld [vmem:[%s286 + $0x60] sm:$0xff]
        %v384 = vld [vmem:[%s286 + $0x68] sm:$0xff]
        %v385 = vld [vmem:[%s286 + $0x70] sm:$0xff]
        %v386 = vld [vmem:[%s286 + $0x78] sm:$0xff]
        %v403 = vunpack.c.l.b16 %v371
        %v404 = vunpack.c.h.b16 %v371
        %v405 = vunpack.c.l.b16 %v372
        %v406 = vunpack.c.h.b16 %v372
        %v407 = vunpack.c.l.b16 %v373
        %v408 = vunpack.c.h.b16 %v373
        %v409 = vunpack.c.l.b16 %v374
        %v410 = vunpack.c.h.b16 %v374
        %v411 = vunpack.c.l.b16 %v375
        %v412 = vunpack.c.h.b16 %v375
        %v413 = vunpack.c.l.b16 %v376
        %v414 = vunpack.c.h.b16 %v376
        %v415 = vunpack.c.l.b16 %v377
        %v416 = vunpack.c.h.b16 %v377
        %v417 = vunpack.c.l.b16 %v378
        %v418 = vunpack.c.h.b16 %v378
        %v419 = vunpack.c.l.b16 %v379
        %v420 = vunpack.c.h.b16 %v379
        %v421 = vunpack.c.l.b16 %v380
        %v422 = vunpack.c.h.b16 %v380
        %v423 = vunpack.c.l.b16 %v381
        %v424 = vunpack.c.h.b16 %v381
        %v425 = vunpack.c.l.b16 %v382
        %v426 = vunpack.c.h.b16 %v382
        %v427 = vunpack.c.l.b16 %v383
        %v428 = vunpack.c.h.b16 %v383
        %v429 = vunpack.c.l.b16 %v384
        %v430 = vunpack.c.h.b16 %v384
        %v431 = vunpack.c.l.b16 %v385
        %v432 = vunpack.c.h.b16 %v385
        %v433 = vunpack.c.l.b16 %v386
        %v434 = vunpack.c.h.b16 %v386
        %v435 = vpack.c.b16 %v405, %v403
        %v436 = vpack.c.b16 %v406, %v404
        %v437 = vpack.c.b16 %v409, %v407
        %v438 = vpack.c.b16 %v410, %v408
        %v439 = vpack.c.b16 %v413, %v411
        %v440 = vpack.c.b16 %v414, %v412
        %v441 = vpack.c.b16 %v417, %v415
        %v442 = vpack.c.b16 %v418, %v416
        %v443 = vpack.c.b16 %v421, %v419
        %v444 = vpack.c.b16 %v422, %v420
        %v445 = vpack.c.b16 %v425, %v423
        %v446 = vpack.c.b16 %v426, %v424
        %v447 = vpack.c.b16 %v429, %v427
        %v448 = vpack.c.b16 %v430, %v428
        %v449 = vpack.c.b16 %v433, %v431
        %v450 = vpack.c.b16 %v434, %v432
        %v499 = vunpack.c.l.b16 %v339
        %v500 = vunpack.c.l.b16 %v340
        %v501 = vunpack.c.l.b16 %v341
        %v502 = vunpack.c.l.b16 %v342
        %v503 = vunpack.c.l.b16 %v343
        %v504 = vunpack.c.l.b16 %v344
        %v505 = vunpack.c.l.b16 %v345
        %v506 = vunpack.c.l.b16 %v346
        %v507 = vunpack.c.l.b16 %v347
        %v508 = vunpack.c.l.b16 %v348
        %v509 = vunpack.c.l.b16 %v349
        %v510 = vunpack.c.l.b16 %v350
        %v511 = vunpack.c.l.b16 %v351
        %v512 = vunpack.c.l.b16 %v352
        %v513 = vunpack.c.l.b16 %v353
        %v514 = vunpack.c.l.b16 %v354
        %v515 = vunpack.c.l.b16 %v355
        %v516 = vunpack.c.l.b16 %v356
        %v517 = vunpack.c.l.b16 %v357
        %v518 = vunpack.c.l.b16 %v358
        %v519 = vunpack.c.l.b16 %v359
        %v520 = vunpack.c.l.b16 %v360
        %v521 = vunpack.c.l.b16 %v361
        %v522 = vunpack.c.l.b16 %v362
        %v523 = vunpack.c.l.b16 %v363
        %v524 = vunpack.c.l.b16 %v364
        %v525 = vunpack.c.l.b16 %v365
        %v526 = vunpack.c.l.b16 %v366
        %v527 = vunpack.c.l.b16 %v367
        %v528 = vunpack.c.l.b16 %v368
        %v529 = vunpack.c.l.b16 %v369
        %v530 = vunpack.c.l.b16 %v370
        %v531 = vpack.c.b16 %v500, %v499
        %v532 = vpack.c.b16 %v502, %v501
        %v533 = vpack.c.b16 %v504, %v503
        %v534 = vpack.c.b16 %v506, %v505
        %v535 = vpack.c.b16 %v508, %v507
        %v536 = vpack.c.b16 %v510, %v509
        %v537 = vpack.c.b16 %v512, %v511
        %v538 = vpack.c.b16 %v514, %v513
        %v539 = vpack.c.b16 %v516, %v515
        %v540 = vpack.c.b16 %v518, %v517
        %v541 = vpack.c.b16 %v520, %v519
        %v542 = vpack.c.b16 %v522, %v521
        %v543 = vpack.c.b16 %v524, %v523
        %v544 = vpack.c.b16 %v526, %v525
        %v545 = vpack.c.b16 %v528, %v527
        %v546 = vpack.c.b16 %v530, %v529
        %563 = vmatprep.subr.bf16.mxu0 0
        %564 = vmatpush1.bf16.msra.mxu0 %v531
        %565 = vmatprep.subr.bf16.mxu0 0
        %566 = vmatpush1.bf16.msra.mxu0 %v532
        %567 = vmatprep.subr.bf16.mxu0 0
        %568 = vmatpush1.bf16.msra.mxu0 %v533
        %569 = vmatprep.subr.bf16.mxu0 0
        %570 = vmatpush1.bf16.msra.mxu0 %v534
        %571 = vmatprep.subr.bf16.mxu0 0
        %572 = vmatpush1.bf16.msra.mxu0 %v535
        %573 = vmatprep.subr.bf16.mxu0 0
        %574 = vmatpush1.bf16.msra.mxu0 %v536
        %575 = vmatprep.subr.bf16.mxu0 0
        %576 = vmatpush1.bf16.msra.mxu0 %v537
        %577 = vmatprep.subr.bf16.mxu0 0
        %578 = vmatpush1.bf16.msra.mxu0 %v538
        %579 = vmatprep.subr.bf16.mxu0 0
        %580 = vmatpush1.bf16.msra.mxu0 %v539
        %581 = vmatprep.subr.bf16.mxu0 0
        %582 = vmatpush1.bf16.msra.mxu0 %v540
        %583 = vmatprep.subr.bf16.mxu0 0
        %584 = vmatpush1.bf16.msra.mxu0 %v541
        %585 = vmatprep.subr.bf16.mxu0 0
        %586 = vmatpush1.bf16.msra.mxu0 %v542
        %587 = vmatprep.subr.bf16.mxu0 0
        %588 = vmatpush1.bf16.msra.mxu0 %v543
        %589 = vmatprep.subr.bf16.mxu0 0
        %590 = vmatpush1.bf16.msra.mxu0 %v544
        %591 = vmatprep.subr.bf16.mxu0 0
        %592 = vmatpush1.bf16.msra.mxu0 %v545
        %593 = vmatprep.subr.bf16.mxu0 0
        %594 = vmatpush1.bf16.msra.mxu0 %v546
        %595 = vmatprep.mubr.bf16.mxu0 %v436
        %596 = vmatmul.mubr.bf16.gmra.mrb[0].mxu0 %v435
        %v597 = vpop.f32.mrb[0].mxu0
        %v598 = vadd.f32 0.0, %v597
        %v599 = vpop.f32.mrb[0].mxu0
        %v600 = vpop.f32.mrb[0].mxu0
        %v601 = vadd.f32 0.0, %v600
        %v602 = vpop.f32.mrb[0].mxu0
        %603 = vmatprep.mubr.bf16.mxu0 %v438
        %604 = vmatmul.mubr.bf16.gmra.mrb[0].mxu0 %v437
        %v605 = vpop.f32.mrb[0].mxu0
        %v606 = vadd.f32 0.0, %v605
        %v607 = vpop.f32.mrb[0].mxu0
        %v608 = vpop.f32.mrb[0].mxu0
        %v609 = vadd.f32 0.0, %v608
        %v610 = vpop.f32.mrb[0].mxu0
        %611 = vmatprep.mubr.bf16.mxu0 %v440
        %612 = vmatmul.mubr.bf16.gmra.mrb[0].mxu0 %v439
        %v613 = vpop.f32.mrb[0].mxu0
        %v614 = vadd.f32 0.0, %v613
        %v615 = vpop.f32.mrb[0].mxu0
        %v616 = vpop.f32.mrb[0].mxu0
        %v617 = vadd.f32 0.0, %v616
        %v618 = vpop.f32.mrb[0].mxu0
        %619 = vmatprep.mubr.bf16.mxu0 %v442
        %620 = vmatmul.mubr.bf16.gmra.mrb[0].mxu0 %v441
        %v621 = vpop.f32.mrb[0].mxu0
        %v622 = vadd.f32 0.0, %v621
        %v623 = vpop.f32.mrb[0].mxu0
        %v624 = vpop.f32.mrb[0].mxu0
        %v625 = vadd.f32 0.0, %v624
        %v626 = vpop.f32.mrb[0].mxu0
        %627 = vmatprep.mubr.bf16.mxu0 %v444
        %628 = vmatmul.mubr.bf16.gmra.mrb[0].mxu0 %v443
        %v629 = vpop.f32.mrb[0].mxu0
        %v630 = vadd.f32 0.0, %v629
        %v631 = vpop.f32.mrb[0].mxu0
        %v632 = vpop.f32.mrb[0].mxu0
        %v633 = vadd.f32 0.0, %v632
        %v634 = vpop.f32.mrb[0].mxu0
        %635 = vmatprep.mubr.bf16.mxu0 %v446
        %636 = vmatmul.mubr.bf16.gmra.mrb[0].mxu0 %v445
        %v637 = vpop.f32.mrb[0].mxu0
        %v638 = vadd.f32 0.0, %v637
        %v639 = vpop.f32.mrb[0].mxu0
        %v640 = vpop.f32.mrb[0].mxu0
        %v641 = vadd.f32 0.0, %v640
        %v642 = vpop.f32.mrb[0].mxu0
        %643 = vmatprep.mubr.bf16.mxu0 %v448
        %644 = vmatmul.mubr.bf16.gmra.mrb[0].mxu0 %v447
        %v645 = vpop.f32.mrb[0].mxu0
        %v646 = vadd.f32 0.0, %v645
        %v647 = vpop.f32.mrb[0].mxu0
        %v648 = vpop.f32.mrb[0].mxu0
        %v649 = vadd.f32 0.0, %v648
        %v650 = vpop.f32.mrb[0].mxu0
        %651 = vmatprep.mubr.bf16.mxu0 %v450
        %652 = vmatmul.mubr.bf16.gmra.mrb[0].mxu0 %v449
        %v653 = vpop.f32.mrb[0].mxu0
        %v654 = vadd.f32 0.0, %v653
        %v655 = vpop.f32.mrb[0].mxu0
        %v656 = vpop.f32.mrb[0].mxu0
        %v657 = vadd.f32 0.0, %v656
        %v658 = vpop.f32.mrb[0].mxu0
        %659 = vdwg.mxu0
        %v660 = vpack.c.bf16 %v601, %v598
        %v661 = vpack.c.bf16 %v609, %v606
        %v662 = vpack.c.bf16 %v617, %v614
        %v663 = vpack.c.bf16 %v625, %v622
        %v664 = vpack.c.bf16 %v633, %v630
        %v665 = vpack.c.bf16 %v641, %v638
        %v666 = vpack.c.bf16 %v649, %v646
        %v667 = vpack.c.bf16 %v657, %v654
        %s668 = scalar_lea.vmem %s286, 128 [#allocation2]
        %v669 = vld [vmem:[%s668] sm:$0xff]
        %v670 = vld [vmem:[%s668 + $0x8] sm:$0xff]
        %v671 = vld [vmem:[%s668 + $0x10] sm:$0xff]
        %v672 = vld [vmem:[%s668 + $0x18] sm:$0xff]
        %v673 = vld [vmem:[%s668 + $0x20] sm:$0xff]
        %v674 = vld [vmem:[%s668 + $0x28] sm:$0xff]
        %v675 = vld [vmem:[%s668 + $0x30] sm:$0xff]
        %v676 = vld [vmem:[%s668 + $0x38] sm:$0xff]
        %v677 = vld [vmem:[%s668 + $0x40] sm:$0xff]
        %v678 = vld [vmem:[%s668 + $0x48] sm:$0xff]
        %v679 = vld [vmem:[%s668 + $0x50] sm:$0xff]
        %v680 = vld [vmem:[%s668 + $0x58] sm:$0xff]
        %v681 = vld [vmem:[%s668 + $0x60] sm:$0xff]
        %v682 = vld [vmem:[%s668 + $0x68] sm:$0xff]
        %v683 = vld [vmem:[%s668 + $0x70] sm:$0xff]
        %v684 = vld [vmem:[%s668 + $0x78] sm:$0xff]
        %v701 = vunpack.c.l.b16 %v669
        %v702 = vunpack.c.h.b16 %v669
        %v703 = vunpack.c.l.b16 %v670
        %v704 = vunpack.c.h.b16 %v670
        %v705 = vunpack.c.l.b16 %v671
        %v706 = vunpack.c.h.b16 %v671
        %v707 = vunpack.c.l.b16 %v672
        %v708 = vunpack.c.h.b16 %v672
        %v709 = vunpack.c.l.b16 %v673
        %v710 = vunpack.c.h.b16 %v673
        %v711 = vunpack.c.l.b16 %v674
        %v712 = vunpack.c.h.b16 %v674
        %v713 = vunpack.c.l.b16 %v675
        %v714 = vunpack.c.h.b16 %v675
        %v715 = vunpack.c.l.b16 %v676
        %v716 = vunpack.c.h.b16 %v676
        %v717 = vunpack.c.l.b16 %v677
        %v718 = vunpack.c.h.b16 %v677
        %v719 = vunpack.c.l.b16 %v678
        %v720 = vunpack.c.h.b16 %v678
        %v721 = vunpack.c.l.b16 %v679
        %v722 = vunpack.c.h.b16 %v679
        %v723 = vunpack.c.l.b16 %v680
        %v724 = vunpack.c.h.b16 %v680
        %v725 = vunpack.c.l.b16 %v681
        %v726 = vunpack.c.h.b16 %v681
        %v727 = vunpack.c.l.b16 %v682
        %v728 = vunpack.c.h.b16 %v682
        %v729 = vunpack.c.l.b16 %v683
        %v730 = vunpack.c.h.b16 %v683
        %v731 = vunpack.c.l.b16 %v684
        %v732 = vunpack.c.h.b16 %v684
        %v733 = vpack.c.b16 %v703, %v701
        %v734 = vpack.c.b16 %v704, %v702
        %v735 = vpack.c.b16 %v707, %v705
        %v736 = vpack.c.b16 %v708, %v706
        %v737 = vpack.c.b16 %v711, %v709
        %v738 = vpack.c.b16 %v712, %v710
        %v739 = vpack.c.b16 %v715, %v713
        %v740 = vpack.c.b16 %v716, %v714
        %v741 = vpack.c.b16 %v719, %v717
        %v742 = vpack.c.b16 %v720, %v718
        %v743 = vpack.c.b16 %v723, %v721
        %v744 = vpack.c.b16 %v724, %v722
        %v745 = vpack.c.b16 %v727, %v725
        %v746 = vpack.c.b16 %v728, %v726
        %v747 = vpack.c.b16 %v731, %v729
        %v748 = vpack.c.b16 %v732, %v730
        %765 = vmatprep.subr.bf16.mxu0 0
        %766 = vmatpush1.bf16.msra.mxu0 %v531
        %767 = vmatprep.subr.bf16.mxu0 0
        %768 = vmatpush1.bf16.msra.mxu0 %v532
        %769 = vmatprep.subr.bf16.mxu0 0
        %770 = vmatpush1.bf16.msra.mxu0 %v533
        %771 = vmatprep.subr.bf16.mxu0 0
        %772 = vmatpush1.bf16.msra.mxu0 %v534
        %773 = vmatprep.subr.bf16.mxu0 0
        %774 = vmatpush1.bf16.msra.mxu0 %v535
        %775 = vmatprep.subr.bf16.mxu0 0
        %776 = vmatpush1.bf16.msra.mxu0 %v536
        %777 = vmatprep.subr.bf16.mxu0 0
        %778 = vmatpush1.bf16.msra.mxu0 %v537
        %779 = vmatprep.subr.bf16.mxu0 0
        %780 = vmatpush1.bf16.msra.mxu0 %v538
        %781 = vmatprep.subr.bf16.mxu0 0
        %782 = vmatpush1.bf16.msra.mxu0 %v539
        %783 = vmatprep.subr.bf16.mxu0 0
        %784 = vmatpush1.bf16.msra.mxu0 %v540
        %785 = vmatprep.subr.bf16.mxu0 0
        %786 = vmatpush1.bf16.msra.mxu0 %v541
        %787 = vmatprep.subr.bf16.mxu0 0
        %788 = vmatpush1.bf16.msra.mxu0 %v542
        %789 = vmatprep.subr.bf16.mxu0 0
        %790 = vmatpush1.bf16.msra.mxu0 %v543
        %791 = vmatprep.subr.bf16.mxu0 0
        %792 = vmatpush1.bf16.msra.mxu0 %v544
        %793 = vmatprep.subr.bf16.mxu0 0
        %794 = vmatpush1.bf16.msra.mxu0 %v545
        %795 = vmatprep.subr.bf16.mxu0 0
        %796 = vmatpush1.bf16.msra.mxu0 %v546
        %797 = vmatprep.mubr.bf16.mxu0 %v734
        %798 = vmatmul.mubr.bf16.gmra.mrb[0].mxu0 %v733
        %v799 = vpop.f32.mrb[0].mxu0
        %v800 = vadd.f32 0.0, %v799
        %v801 = vpop.f32.mrb[0].mxu0
        %v802 = vpop.f32.mrb[0].mxu0
        %v803 = vadd.f32 0.0, %v802
        %v804 = vpop.f32.mrb[0].mxu0
        %805 = vmatprep.mubr.bf16.mxu0 %v736
        %806 = vmatmul.mubr.bf16.gmra.mrb[0].mxu0 %v735
        %v807 = vpop.f32.mrb[0].mxu0
        %v808 = vadd.f32 0.0, %v807
        %v809 = vpop.f32.mrb[0].mxu0
        %v810 = vpop.f32.mrb[0].mxu0
        %v811 = vadd.f32 0.0, %v810
        %v812 = vpop.f32.mrb[0].mxu0
        %813 = vmatprep.mubr.bf16.mxu0 %v738
        %814 = vmatmul.mubr.bf16.gmra.mrb[0].mxu0 %v737
        %v815 = vpop.f32.mrb[0].mxu0
        %v816 = vadd.f32 0.0, %v815
        %v817 = vpop.f32.mrb[0].mxu0
        %v818 = vpop.f32.mrb[0].mxu0
        %v819 = vadd.f32 0.0, %v818
        %v820 = vpop.f32.mrb[0].mxu0
        %821 = vmatprep.mubr.bf16.mxu0 %v740
        %822 = vmatmul.mubr.bf16.gmra.mrb[0].mxu0 %v739
        %v823 = vpop.f32.mrb[0].mxu0
        %v824 = vadd.f32 0.0, %v823
        %v825 = vpop.f32.mrb[0].mxu0
        %v826 = vpop.f32.mrb[0].mxu0
        %v827 = vadd.f32 0.0, %v826
        %v828 = vpop.f32.mrb[0].mxu0
        %829 = vmatprep.mubr.bf16.mxu0 %v742
        %830 = vmatmul.mubr.bf16.gmra.mrb[0].mxu0 %v741
        %v831 = vpop.f32.mrb[0].mxu0
        %v832 = vadd.f32 0.0, %v831
        %v833 = vpop.f32.mrb[0].mxu0
        %v834 = vpop.f32.mrb[0].mxu0
        %v835 = vadd.f32 0.0, %v834
        %v836 = vpop.f32.mrb[0].mxu0
        %837 = vmatprep.mubr.bf16.mxu0 %v744
        %838 = vmatmul.mubr.bf16.gmra.mrb[0].mxu0 %v743
        %v839 = vpop.f32.mrb[0].mxu0
        %v840 = vadd.f32 0.0, %v839
        %v841 = vpop.f32.mrb[0].mxu0
        %v842 = vpop.f32.mrb[0].mxu0
        %v843 = vadd.f32 0.0, %v842
        %v844 = vpop.f32.mrb[0].mxu0
        %845 = vmatprep.mubr.bf16.mxu0 %v746
        %846 = vmatmul.mubr.bf16.gmra.mrb[0].mxu0 %v745
        %v847 = vpop.f32.mrb[0].mxu0
        %v848 = vadd.f32 0.0, %v847
        %v849 = vpop.f32.mrb[0].mxu0
        %v850 = vpop.f32.mrb[0].mxu0
        %v851 = vadd.f32 0.0, %v850
        %v852 = vpop.f32.mrb[0].mxu0
        %853 = vmatprep.mubr.bf16.mxu0 %v748
        %854 = vmatmul.mubr.bf16.gmra.mrb[0].mxu0 %v747
        %v855 = vpop.f32.mrb[0].mxu0
        %v856 = vadd.f32 0.0, %v855
        %v857 = vpop.f32.mrb[0].mxu0
        %v858 = vpop.f32.mrb[0].mxu0
        %v859 = vadd.f32 0.0, %v858
        %v860 = vpop.f32.mrb[0].mxu0
        %861 = vdwg.mxu0
        %v862 = vpack.c.bf16 %v803, %v800
        %v863 = vpack.c.bf16 %v811, %v808
        %v864 = vpack.c.bf16 %v819, %v816
        %v865 = vpack.c.bf16 %v827, %v824
        %v866 = vpack.c.bf16 %v835, %v832
        %v867 = vpack.c.bf16 %v843, %v840
        %v868 = vpack.c.bf16 %v851, %v848
        %v869 = vpack.c.bf16 %v859, %v856
        %s870 = scalar_lea.vmem %s286, 256 [#allocation2]
        %v871 = vld [vmem:[%s870] sm:$0xff]
        %v872 = vld [vmem:[%s870 + $0x8] sm:$0xff]
        %v873 = vld [vmem:[%s870 + $0x10] sm:$0xff]
        %v874 = vld [vmem:[%s870 + $0x18] sm:$0xff]
        %v875 = vld [vmem:[%s870 + $0x20] sm:$0xff]
        %v876 = vld [vmem:[%s870 + $0x28] sm:$0xff]
        %v877 = vld [vmem:[%s870 + $0x30] sm:$0xff]
        %v878 = vld [vmem:[%s870 + $0x38] sm:$0xff]
        %v879 = vld [vmem:[%s870 + $0x40] sm:$0xff]
        %v880 = vld [vmem:[%s870 + $0x48] sm:$0xff]
        %v881 = vld [vmem:[%s870 + $0x50] sm:$0xff]
        %v882 = vld [vmem:[%s870 + $0x58] sm:$0xff]
        %v883 = vld [vmem:[%s870 + $0x60] sm:$0xff]
        %v884 = vld [vmem:[%s870 + $0x68] sm:$0xff]
        %v885 = vld [vmem:[%s870 + $0x70] sm:$0xff]
        %v886 = vld [vmem:[%s870 + $0x78] sm:$0xff]
        %v903 = vunpack.c.l.b16 %v871
        %v904 = vunpack.c.h.b16 %v871
        %v905 = vunpack.c.l.b16 %v872
        %v906 = vunpack.c.h.b16 %v872
        %v907 = vunpack.c.l.b16 %v873
        %v908 = vunpack.c.h.b16 %v873
        %v909 = vunpack.c.l.b16 %v874
        %v910 = vunpack.c.h.b16 %v874
        %v911 = vunpack.c.l.b16 %v875
        %v912 = vunpack.c.h.b16 %v875
        %v913 = vunpack.c.l.b16 %v876
        %v914 = vunpack.c.h.b16 %v876
        %v915 = vunpack.c.l.b16 %v877
        %v916 = vunpack.c.h.b16 %v877
        %v917 = vunpack.c.l.b16 %v878
        %v918 = vunpack.c.h.b16 %v878
        %v919 = vunpack.c.l.b16 %v879
        %v920 = vunpack.c.h.b16 %v879
        %v921 = vunpack.c.l.b16 %v880
        %v922 = vunpack.c.h.b16 %v880
        %v923 = vunpack.c.l.b16 %v881
        %v924 = vunpack.c.h.b16 %v881
        %v925 = vunpack.c.l.b16 %v882
        %v926 = vunpack.c.h.b16 %v882
        %v927 = vunpack.c.l.b16 %v883
        %v928 = vunpack.c.h.b16 %v883
        %v929 = vunpack.c.l.b16 %v884
        %v930 = vunpack.c.h.b16 %v884
        %v931 = vunpack.c.l.b16 %v885
        %v932 = vunpack.c.h.b16 %v885
        %v933 = vunpack.c.l.b16 %v886
        %v934 = vunpack.c.h.b16 %v886
        %v935 = vpack.c.b16 %v905, %v903
        %v936 = vpack.c.b16 %v906, %v904
        %v937 = vpack.c.b16 %v909, %v907
        %v938 = vpack.c.b16 %v910, %v908
        %v939 = vpack.c.b16 %v913, %v911
        %v940 = vpack.c.b16 %v914, %v912
        %v941 = vpack.c.b16 %v917, %v915
        %v942 = vpack.c.b16 %v918, %v916
        %v943 = vpack.c.b16 %v921, %v919
        %v944 = vpack.c.b16 %v922, %v920
        %v945 = vpack.c.b16 %v925, %v923
        %v946 = vpack.c.b16 %v926, %v924
        %v947 = vpack.c.b16 %v929, %v927
        %v948 = vpack.c.b16 %v930, %v928
        %v949 = vpack.c.b16 %v933, %v931
        %v950 = vpack.c.b16 %v934, %v932
        %967 = vmatprep.subr.bf16.mxu0 0
        %968 = vmatpush1.bf16.msra.mxu0 %v531
        %969 = vmatprep.subr.bf16.mxu0 0
        %970 = vmatpush1.bf16.msra.mxu0 %v532
        %971 = vmatprep.subr.bf16.mxu0 0
        %972 = vmatpush1.bf16.msra.mxu0 %v533
        %973 = vmatprep.subr.bf16.mxu0 0
        %974 = vmatpush1.bf16.msra.mxu0 %v534
        %975 = vmatprep.subr.bf16.mxu0 0
        %976 = vmatpush1.bf16.msra.mxu0 %v535
        %977 = vmatprep.subr.bf16.mxu0 0
        %978 = vmatpush1.bf16.msra.mxu0 %v536
        %979 = vmatprep.subr.bf16.mxu0 0
        %980 = vmatpush1.bf16.msra.mxu0 %v537
        %981 = vmatprep.subr.bf16.mxu0 0
        %982 = vmatpush1.bf16.msra.mxu0 %v538
        %983 = vmatprep.subr.bf16.mxu0 0
        %984 = vmatpush1.bf16.msra.mxu0 %v539
        %985 = vmatprep.subr.bf16.mxu0 0
        %986 = vmatpush1.bf16.msra.mxu0 %v540
        %987 = vmatprep.subr.bf16.mxu0 0
        %988 = vmatpush1.bf16.msra.mxu0 %v541
        %989 = vmatprep.subr.bf16.mxu0 0
        %990 = vmatpush1.bf16.msra.mxu0 %v542
        %991 = vmatprep.subr.bf16.mxu0 0
        %992 = vmatpush1.bf16.msra.mxu0 %v543
        %993 = vmatprep.subr.bf16.mxu0 0
        %994 = vmatpush1.bf16.msra.mxu0 %v544
        %995 = vmatprep.subr.bf16.mxu0 0
        %996 = vmatpush1.bf16.msra.mxu0 %v545
        %997 = vmatprep.subr.bf16.mxu0 0
        %998 = vmatpush1.bf16.msra.mxu0 %v546
        %999 = vmatprep.mubr.bf16.mxu0 %v936
        %1000 = vmatmul.mubr.bf16.gmra.mrb[0].mxu0 %v935
        %v1001 = vpop.f32.mrb[0].mxu0
        %v1002 = vadd.f32 0.0, %v1001
        %v1003 = vpop.f32.mrb[0].mxu0
        %v1004 = vpop.f32.mrb[0].mxu0
        %v1005 = vadd.f32 0.0, %v1004
        %v1006 = vpop.f32.mrb[0].mxu0
        %1007 = vmatprep.mubr.bf16.mxu0 %v938
        %1008 = vmatmul.mubr.bf16.gmra.mrb[0].mxu0 %v937
        %v1009 = vpop.f32.mrb[0].mxu0
        %v1010 = vadd.f32 0.0, %v1009
        %v1011 = vpop.f32.mrb[0].mxu0
        %v1012 = vpop.f32.mrb[0].mxu0
        %v1013 = vadd.f32 0.0, %v1012
        %v1014 = vpop.f32.mrb[0].mxu0
        %1015 = vmatprep.mubr.bf16.mxu0 %v940
        %1016 = vmatmul.mubr.bf16.gmra.mrb[0].mxu0 %v939
        %v1017 = vpop.f32.mrb[0].mxu0
        %v1018 = vadd.f32 0.0, %v1017
        %v1019 = vpop.f32.mrb[0].mxu0
        %v1020 = vpop.f32.mrb[0].mxu0
        %v1021 = vadd.f32 0.0, %v1020
        %v1022 = vpop.f32.mrb[0].mxu0
        %1023 = vmatprep.mubr.bf16.mxu0 %v942
        %1024 = vmatmul.mubr.bf16.gmra.mrb[0].mxu0 %v941
        %v1025 = vpop.f32.mrb[0].mxu0
        %v1026 = vadd.f32 0.0, %v1025
        %v1027 = vpop.f32.mrb[0].mxu0
        %v1028 = vpop.f32.mrb[0].mxu0
        %v1029 = vadd.f32 0.0, %v1028
        %v1030 = vpop.f32.mrb[0].mxu0
        %1031 = vmatprep.mubr.bf16.mxu0 %v944
        %1032 = vmatmul.mubr.bf16.gmra.mrb[0].mxu0 %v943
        %v1033 = vpop.f32.mrb[0].mxu0
        %v1034 = vadd.f32 0.0, %v1033
        %v1035 = vpop.f32.mrb[0].mxu0
        %v1036 = vpop.f32.mrb[0].mxu0
        %v1037 = vadd.f32 0.0, %v1036
        %v1038 = vpop.f32.mrb[0].mxu0
        %1039 = vmatprep.mubr.bf16.mxu0 %v946
        %1040 = vmatmul.mubr.bf16.gmra.mrb[0].mxu0 %v945
        %v1041 = vpop.f32.mrb[0].mxu0
        %v1042 = vadd.f32 0.0, %v1041
        %v1043 = vpop.f32.mrb[0].mxu0
        %v1044 = vpop.f32.mrb[0].mxu0
        %v1045 = vadd.f32 0.0, %v1044
        %v1046 = vpop.f32.mrb[0].mxu0
        %1047 = vmatprep.mubr.bf16.mxu0 %v948
        %1048 = vmatmul.mubr.bf16.gmra.mrb[0].mxu0 %v947
        %v1049 = vpop.f32.mrb[0].mxu0
        %v1050 = vadd.f32 0.0, %v1049
        %v1051 = vpop.f32.mrb[0].mxu0
        %v1052 = vpop.f32.mrb[0].mxu0
        %v1053 = vadd.f32 0.0, %v1052
        %v1054 = vpop.f32.mrb[0].mxu0
        %1055 = vmatprep.mubr.bf16.mxu0 %v950
        %1056 = vmatmul.mubr.bf16.gmra.mrb[0].mxu0 %v949
        %v1057 = vpop.f32.mrb[0].mxu0
        %v1058 = vadd.f32 0.0, %v1057
        %v1059 = vpop.f32.mrb[0].mxu0
        %v1060 = vpop.f32.mrb[0].mxu0
        %v1061 = vadd.f32 0.0, %v1060
        %v1062 = vpop.f32.mrb[0].mxu0
        %1063 = vdwg.mxu0
        %v1064 = vpack.c.bf16 %v1005, %v1002
        %v1065 = vpack.c.bf16 %v1013, %v1010
        %v1066 = vpack.c.bf16 %v1021, %v1018
        %v1067 = vpack.c.bf16 %v1029, %v1026
        %v1068 = vpack.c.bf16 %v1037, %v1034
        %v1069 = vpack.c.bf16 %v1045, %v1042
        %v1070 = vpack.c.bf16 %v1053, %v1050
        %v1071 = vpack.c.bf16 %v1061, %v1058
        %s1072 = scalar_lea.vmem %s286, 384 [#allocation2]
        %v1073 = vld [vmem:[%s1072] sm:$0xff]
        %v1074 = vld [vmem:[%s1072 + $0x8] sm:$0xff]
        %v1075 = vld [vmem:[%s1072 + $0x10] sm:$0xff]
        %v1076 = vld [vmem:[%s1072 + $0x18] sm:$0xff]
        %v1077 = vld [vmem:[%s1072 + $0x20] sm:$0xff]
        %v1078 = vld [vmem:[%s1072 + $0x28] sm:$0xff]
        %v1079 = vld [vmem:[%s1072 + $0x30] sm:$0xff]
        %v1080 = vld [vmem:[%s1072 + $0x38] sm:$0xff]
        %v1081 = vld [vmem:[%s1072 + $0x40] sm:$0xff]
        %v1082 = vld [vmem:[%s1072 + $0x48] sm:$0xff]
        %v1083 = vld [vmem:[%s1072 + $0x50] sm:$0xff]
        %v1084 = vld [vmem:[%s1072 + $0x58] sm:$0xff]
        %v1085 = vld [vmem:[%s1072 + $0x60] sm:$0xff]
        %v1086 = vld [vmem:[%s1072 + $0x68] sm:$0xff]
        %v1087 = vld [vmem:[%s1072 + $0x70] sm:$0xff]
        %v1088 = vld [vmem:[%s1072 + $0x78] sm:$0xff]
        %v1105 = vunpack.c.l.b16 %v1073
        %v1106 = vunpack.c.h.b16 %v1073
        %v1107 = vunpack.c.l.b16 %v1074
        %v1108 = vunpack.c.h.b16 %v1074
        %v1109 = vunpack.c.l.b16 %v1075
        %v1110 = vunpack.c.h.b16 %v1075
        %v1111 = vunpack.c.l.b16 %v1076
        %v1112 = vunpack.c.h.b16 %v1076
        %v1113 = vunpack.c.l.b16 %v1077
        %v1114 = vunpack.c.h.b16 %v1077
        %v1115 = vunpack.c.l.b16 %v1078
        %v1116 = vunpack.c.h.b16 %v1078
        %v1117 = vunpack.c.l.b16 %v1079
        %v1118 = vunpack.c.h.b16 %v1079
        %v1119 = vunpack.c.l.b16 %v1080
        %v1120 = vunpack.c.h.b16 %v1080
        %v1121 = vunpack.c.l.b16 %v1081
        %v1122 = vunpack.c.h.b16 %v1081
        %v1123 = vunpack.c.l.b16 %v1082
        %v1124 = vunpack.c.h.b16 %v1082
        %v1125 = vunpack.c.l.b16 %v1083
        %v1126 = vunpack.c.h.b16 %v1083
        %v1127 = vunpack.c.l.b16 %v1084
        %v1128 = vunpack.c.h.b16 %v1084
        %v1129 = vunpack.c.l.b16 %v1085
        %v1130 = vunpack.c.h.b16 %v1085
        %v1131 = vunpack.c.l.b16 %v1086
        %v1132 = vunpack.c.h.b16 %v1086
        %v1133 = vunpack.c.l.b16 %v1087
        %v1134 = vunpack.c.h.b16 %v1087
        %v1135 = vunpack.c.l.b16 %v1088
        %v1136 = vunpack.c.h.b16 %v1088
        %v1137 = vpack.c.b16 %v1107, %v1105
        %v1138 = vpack.c.b16 %v1108, %v1106
        %v1139 = vpack.c.b16 %v1111, %v1109
        %v1140 = vpack.c.b16 %v1112, %v1110
        %v1141 = vpack.c.b16 %v1115, %v1113
        %v1142 = vpack.c.b16 %v1116, %v1114
        %v1143 = vpack.c.b16 %v1119, %v1117
        %v1144 = vpack.c.b16 %v1120, %v1118
        %v1145 = vpack.c.b16 %v1123, %v1121
        %v1146 = vpack.c.b16 %v1124, %v1122
        %v1147 = vpack.c.b16 %v1127, %v1125
        %v1148 = vpack.c.b16 %v1128, %v1126
        %v1149 = vpack.c.b16 %v1131, %v1129
        %v1150 = vpack.c.b16 %v1132, %v1130
        %v1151 = vpack.c.b16 %v1135, %v1133
        %v1152 = vpack.c.b16 %v1136, %v1134
        %1169 = vmatprep.subr.bf16.mxu0 0
        %1170 = vmatpush1.bf16.msra.mxu0 %v531
        %1171 = vmatprep.subr.bf16.mxu0 0
        %1172 = vmatpush1.bf16.msra.mxu0 %v532
        %1173 = vmatprep.subr.bf16.mxu0 0
        %1174 = vmatpush1.bf16.msra.mxu0 %v533
        %1175 = vmatprep.subr.bf16.mxu0 0
        %1176 = vmatpush1.bf16.msra.mxu0 %v534
        %1177 = vmatprep.subr.bf16.mxu0 0
        %1178 = vmatpush1.bf16.msra.mxu0 %v535
        %1179 = vmatprep.subr.bf16.mxu0 0
        %1180 = vmatpush1.bf16.msra.mxu0 %v536
        %1181 = vmatprep.subr.bf16.mxu0 0
        %1182 = vmatpush1.bf16.msra.mxu0 %v537
        %1183 = vmatprep.subr.bf16.mxu0 0
        %1184 = vmatpush1.bf16.msra.mxu0 %v538
        %1185 = vmatprep.subr.bf16.mxu0 0
        %1186 = vmatpush1.bf16.msra.mxu0 %v539
        %1187 = vmatprep.subr.bf16.mxu0 0
        %1188 = vmatpush1.bf16.msra.mxu0 %v540
        %1189 = vmatprep.subr.bf16.mxu0 0
        %1190 = vmatpush1.bf16.msra.mxu0 %v541
        %1191 = vmatprep.subr.bf16.mxu0 0
        %1192 = vmatpush1.bf16.msra.mxu0 %v542
        %1193 = vmatprep.subr.bf16.mxu0 0
        %1194 = vmatpush1.bf16.msra.mxu0 %v543
        %1195 = vmatprep.subr.bf16.mxu0 0
        %1196 = vmatpush1.bf16.msra.mxu0 %v544
        %1197 = vmatprep.subr.bf16.mxu0 0
        %1198 = vmatpush1.bf16.msra.mxu0 %v545
        %1199 = vmatprep.subr.bf16.mxu0 0
        %1200 = vmatpush1.bf16.msra.mxu0 %v546
        %1201 = vmatprep.mubr.bf16.mxu0 %v1138
        %1202 = vmatmul.mubr.bf16.gmra.mrb[0].mxu0 %v1137
        %v1203 = vpop.f32.mrb[0].mxu0
        %v1204 = vadd.f32 0.0, %v1203
        %v1205 = vpop.f32.mrb[0].mxu0
        %v1206 = vpop.f32.mrb[0].mxu0
        %v1207 = vadd.f32 0.0, %v1206
        %v1208 = vpop.f32.mrb[0].mxu0
        %1209 = vmatprep.mubr.bf16.mxu0 %v1140
        %1210 = vmatmul.mubr.bf16.gmra.mrb[0].mxu0 %v1139
        %v1211 = vpop.f32.mrb[0].mxu0
        %v1212 = vadd.f32 0.0, %v1211
        %v1213 = vpop.f32.mrb[0].mxu0
        %v1214 = vpop.f32.mrb[0].mxu0
        %v1215 = vadd.f32 0.0, %v1214
        %v1216 = vpop.f32.mrb[0].mxu0
        %1217 = vmatprep.mubr.bf16.mxu0 %v1142
        %1218 = vmatmul.mubr.bf16.gmra.mrb[0].mxu0 %v1141
        %v1219 = vpop.f32.mrb[0].mxu0
        %v1220 = vadd.f32 0.0, %v1219
        %v1221 = vpop.f32.mrb[0].mxu0
        %v1222 = vpop.f32.mrb[0].mxu0
        %v1223 = vadd.f32 0.0, %v1222
        %v1224 = vpop.f32.mrb[0].mxu0
        %1225 = vmatprep.mubr.bf16.mxu0 %v1144
        %1226 = vmatmul.mubr.bf16.gmra.mrb[0].mxu0 %v1143
        %v1227 = vpop.f32.mrb[0].mxu0
        %v1228 = vadd.f32 0.0, %v1227
        %v1229 = vpop.f32.mrb[0].mxu0
        %v1230 = vpop.f32.mrb[0].mxu0
        %v1231 = vadd.f32 0.0, %v1230
        %v1232 = vpop.f32.mrb[0].mxu0
        %1233 = vmatprep.mubr.bf16.mxu0 %v1146
        %1234 = vmatmul.mubr.bf16.gmra.mrb[0].mxu0 %v1145
        %v1235 = vpop.f32.mrb[0].mxu0
        %v1236 = vadd.f32 0.0, %v1235
        %v1237 = vpop.f32.mrb[0].mxu0
        %v1238 = vpop.f32.mrb[0].mxu0
        %v1239 = vadd.f32 0.0, %v1238
        %v1240 = vpop.f32.mrb[0].mxu0
        %1241 = vmatprep.mubr.bf16.mxu0 %v1148
        %1242 = vmatmul.mubr.bf16.gmra.mrb[0].mxu0 %v1147
        %v1243 = vpop.f32.mrb[0].mxu0
        %v1244 = vadd.f32 0.0, %v1243
        %v1245 = vpop.f32.mrb[0].mxu0
        %v1246 = vpop.f32.mrb[0].mxu0
        %v1247 = vadd.f32 0.0, %v1246
        %v1248 = vpop.f32.mrb[0].mxu0
        %1249 = vmatprep.mubr.bf16.mxu0 %v1150
        %1250 = vmatmul.mubr.bf16.gmra.mrb[0].mxu0 %v1149
        %v1251 = vpop.f32.mrb[0].mxu0
        %v1252 = vadd.f32 0.0, %v1251
        %v1253 = vpop.f32.mrb[0].mxu0
        %v1254 = vpop.f32.mrb[0].mxu0
        %v1255 = vadd.f32 0.0, %v1254
        %v1256 = vpop.f32.mrb[0].mxu0
        %1257 = vmatprep.mubr.bf16.mxu0 %v1152
        %1258 = vmatmul.mubr.bf16.gmra.mrb[0].mxu0 %v1151
        %v1259 = vpop.f32.mrb[0].mxu0
        %v1260 = vadd.f32 0.0, %v1259
        %v1261 = vpop.f32.mrb[0].mxu0
        %v1262 = vpop.f32.mrb[0].mxu0
        %v1263 = vadd.f32 0.0, %v1262
        %v1264 = vpop.f32.mrb[0].mxu0
        %1265 = vdwg.mxu0
        %v1266 = vpack.c.bf16 %v1207, %v1204
        %v1267 = vpack.c.bf16 %v1215, %v1212
        %v1268 = vpack.c.bf16 %v1223, %v1220
        %v1269 = vpack.c.bf16 %v1231, %v1228
        %v1270 = vpack.c.bf16 %v1239, %v1236
        %v1271 = vpack.c.bf16 %v1247, %v1244
        %v1272 = vpack.c.bf16 %v1255, %v1252
        %v1273 = vpack.c.bf16 %v1263, %v1260
        %v1274 = vld [vmem:[%s299] sm:$0xf]
        %v1275 = vld [vmem:[%s299 + $0x4] sm:$0xf]
        %v1276 = vld [vmem:[%s299 + $0x8] sm:$0xf]
        %v1277 = vld [vmem:[%s299 + $0xc] sm:$0xf]
        %v1278 = vld [vmem:[%s299 + $0x10] sm:$0xf]
        %v1279 = vld [vmem:[%s299 + $0x14] sm:$0xf]
        %v1280 = vld [vmem:[%s299 + $0x18] sm:$0xf]
        %v1281 = vld [vmem:[%s299 + $0x1c] sm:$0xf]
        %v1282 = vld [vmem:[%s299 + $0x20] sm:$0xf]
        %v1283 = vld [vmem:[%s299 + $0x24] sm:$0xf]
        %v1284 = vld [vmem:[%s299 + $0x28] sm:$0xf]
        %v1285 = vld [vmem:[%s299 + $0x2c] sm:$0xf]
        %v1286 = vld [vmem:[%s299 + $0x30] sm:$0xf]
        %v1287 = vld [vmem:[%s299 + $0x34] sm:$0xf]
        %v1288 = vld [vmem:[%s299 + $0x38] sm:$0xf]
        %v1289 = vld [vmem:[%s299 + $0x3c] sm:$0xf]
        %v1306 = vunpack.c.l.b16 %v1274
        %v1307 = vunpack.c.l.b16 %v1275
        %v1308 = vunpack.c.l.b16 %v1276
        %v1309 = vunpack.c.l.b16 %v1277
        %v1310 = vunpack.c.l.b16 %v1278
        %v1311 = vunpack.c.l.b16 %v1279
        %v1312 = vunpack.c.l.b16 %v1280
        %v1313 = vunpack.c.l.b16 %v1281
        %v1314 = vunpack.c.l.b16 %v1282
        %v1315 = vunpack.c.l.b16 %v1283
        %v1316 = vunpack.c.l.b16 %v1284
        %v1317 = vunpack.c.l.b16 %v1285
        %v1318 = vunpack.c.l.b16 %v1286
        %v1319 = vunpack.c.l.b16 %v1287
        %v1320 = vunpack.c.l.b16 %v1288
        %v1321 = vunpack.c.l.b16 %v1289
        %v1322 = vpack.c.b16 %v1307, %v1306
        %v1323 = vpack.c.b16 %v1309, %v1308
        %v1324 = vpack.c.b16 %v1311, %v1310
        %v1325 = vpack.c.b16 %v1313, %v1312
        %v1326 = vpack.c.b16 %v1315, %v1314
        %v1327 = vpack.c.b16 %v1317, %v1316
        %v1328 = vpack.c.b16 %v1319, %v1318
        %v1329 = vpack.c.b16 %v1321, %v1320
        %v1338 = vld [vmem:[#allocation8] sm:$0xf]
        %v1339 = vld [vmem:[#allocation8 + $0x4] sm:$0xf]
        %v1340 = vld [vmem:[#allocation8 + $0x8] sm:$0xf]
        %v1341 = vld [vmem:[#allocation8 + $0xc] sm:$0xf]
        %v1342 = vld [vmem:[#allocation8 + $0x10] sm:$0xf]
        %v1343 = vld [vmem:[#allocation8 + $0x14] sm:$0xf]
        %v1344 = vld [vmem:[#allocation8 + $0x18] sm:$0xf]
        %v1345 = vld [vmem:[#allocation8 + $0x1c] sm:$0xf]
        %v1346 = vld [vmem:[#allocation8 + $0x20] sm:$0xf]
        %v1347 = vld [vmem:[#allocation8 + $0x24] sm:$0xf]
        %v1348 = vld [vmem:[#allocation8 + $0x28] sm:$0xf]
        %v1349 = vld [vmem:[#allocation8 + $0x2c] sm:$0xf]
        %v1350 = vld [vmem:[#allocation8 + $0x30] sm:$0xf]
        %v1351 = vld [vmem:[#allocation8 + $0x34] sm:$0xf]
        %v1352 = vld [vmem:[#allocation8 + $0x38] sm:$0xf]
        %v1353 = vld [vmem:[#allocation8 + $0x3c] sm:$0xf]
        %v1354 = vld [vmem:[#allocation8 + $0x40] sm:$0xf]
        %v1355 = vld [vmem:[#allocation8 + $0x44] sm:$0xf]
        %v1356 = vld [vmem:[#allocation8 + $0x48] sm:$0xf]
        %v1357 = vld [vmem:[#allocation8 + $0x4c] sm:$0xf]
        %v1358 = vld [vmem:[#allocation8 + $0x50] sm:$0xf]
        %v1359 = vld [vmem:[#allocation8 + $0x54] sm:$0xf]
        %v1360 = vld [vmem:[#allocation8 + $0x58] sm:$0xf]
        %v1361 = vld [vmem:[#allocation8 + $0x5c] sm:$0xf]
        %v1362 = vld [vmem:[#allocation8 + $0x60] sm:$0xf]
        %v1363 = vld [vmem:[#allocation8 + $0x64] sm:$0xf]
        %v1364 = vld [vmem:[#allocation8 + $0x68] sm:$0xf]
        %v1365 = vld [vmem:[#allocation8 + $0x6c] sm:$0xf]
        %v1366 = vld [vmem:[#allocation8 + $0x70] sm:$0xf]
        %v1367 = vld [vmem:[#allocation8 + $0x74] sm:$0xf]
        %v1368 = vld [vmem:[#allocation8 + $0x78] sm:$0xf]
        %v1369 = vld [vmem:[#allocation8 + $0x7c] sm:$0xf]
        %v1370 = vld [vmem:[#allocation8 + $0x80] sm:$0xf]
        %v1371 = vld [vmem:[#allocation8 + $0x84] sm:$0xf]
        %v1372 = vld [vmem:[#allocation8 + $0x88] sm:$0xf]
        %v1373 = vld [vmem:[#allocation8 + $0x8c] sm:$0xf]
        %v1374 = vld [vmem:[#allocation8 + $0x90] sm:$0xf]
        %v1375 = vld [vmem:[#allocation8 + $0x94] sm:$0xf]
        %v1376 = vld [vmem:[#allocation8 + $0x98] sm:$0xf]
        %v1377 = vld [vmem:[#allocation8 + $0x9c] sm:$0xf]
        %v1378 = vld [vmem:[#allocation8 + $0xa0] sm:$0xf]
        %v1379 = vld [vmem:[#allocation8 + $0xa4] sm:$0xf]
        %v1380 = vld [vmem:[#allocation8 + $0xa8] sm:$0xf]
        %v1381 = vld [vmem:[#allocation8 + $0xac] sm:$0xf]
        %v1382 = vld [vmem:[#allocation8 + $0xb0] sm:$0xf]
        %v1383 = vld [vmem:[#allocation8 + $0xb4] sm:$0xf]
        %v1384 = vld [vmem:[#allocation8 + $0xb8] sm:$0xf]
        %v1385 = vld [vmem:[#allocation8 + $0xbc] sm:$0xf]
        %v1386 = vld [vmem:[#allocation8 + $0xc0] sm:$0xf]
        %v1387 = vld [vmem:[#allocation8 + $0xc4] sm:$0xf]
        %v1388 = vld [vmem:[#allocation8 + $0xc8] sm:$0xf]
        %v1389 = vld [vmem:[#allocation8 + $0xcc] sm:$0xf]
        %v1390 = vld [vmem:[#allocation8 + $0xd0] sm:$0xf]
        %v1391 = vld [vmem:[#allocation8 + $0xd4] sm:$0xf]
        %v1392 = vld [vmem:[#allocation8 + $0xd8] sm:$0xf]
        %v1393 = vld [vmem:[#allocation8 + $0xdc] sm:$0xf]
        %v1394 = vld [vmem:[#allocation8 + $0xe0] sm:$0xf]
        %v1395 = vld [vmem:[#allocation8 + $0xe4] sm:$0xf]
        %v1396 = vld [vmem:[#allocation8 + $0xe8] sm:$0xf]
        %v1397 = vld [vmem:[#allocation8 + $0xec] sm:$0xf]
        %v1398 = vld [vmem:[#allocation8 + $0xf0] sm:$0xf]
        %v1399 = vld [vmem:[#allocation8 + $0xf4] sm:$0xf]
        %v1400 = vld [vmem:[#allocation8 + $0xf8] sm:$0xf]
        %v1401 = vld [vmem:[#allocation8 + $0xfc] sm:$0xf]
        %v1402 = vld [vmem:[#allocation8 + $0x100] sm:$0xf]
        %v1403 = vld [vmem:[#allocation8 + $0x104] sm:$0xf]
        %v1404 = vld [vmem:[#allocation8 + $0x108] sm:$0xf]
        %v1405 = vld [vmem:[#allocation8 + $0x10c] sm:$0xf]
        %v1406 = vld [vmem:[#allocation8 + $0x110] sm:$0xf]
        %v1407 = vld [vmem:[#allocation8 + $0x114] sm:$0xf]
        %v1408 = vld [vmem:[#allocation8 + $0x118] sm:$0xf]
        %v1409 = vld [vmem:[#allocation8 + $0x11c] sm:$0xf]
        %v1410 = vld [vmem:[#allocation8 + $0x120] sm:$0xf]
        %v1411 = vld [vmem:[#allocation8 + $0x124] sm:$0xf]
        %v1412 = vld [vmem:[#allocation8 + $0x128] sm:$0xf]
        %v1413 = vld [vmem:[#allocation8 + $0x12c] sm:$0xf]
        %v1414 = vld [vmem:[#allocation8 + $0x130] sm:$0xf]
        %v1415 = vld [vmem:[#allocation8 + $0x134] sm:$0xf]
        %v1416 = vld [vmem:[#allocation8 + $0x138] sm:$0xf]
        %v1417 = vld [vmem:[#allocation8 + $0x13c] sm:$0xf]
        %v1418 = vld [vmem:[%s4] sm:$0x1]
        %v1420 = vlaneseq
        %v1421 = vshrl.u32 %v1420, 7
        %v1422 = vsub.s32 0, %v1421
        %v1423 = vrot.slane %v1418, %v1422
        %v1505 = vunpack.c.l.b16 %v1338
        %v1506 = vunpack.c.l.b16 %v1339
        %v1507 = vunpack.c.l.b16 %v1340
        %v1508 = vunpack.c.l.b16 %v1341
        %v1509 = vunpack.c.l.b16 %v1342
        %v1510 = vunpack.c.l.b16 %v1343
        %v1511 = vunpack.c.l.b16 %v1344
        %v1512 = vunpack.c.l.b16 %v1345
        %v1513 = vunpack.c.l.b16 %v1346
        %v1514 = vunpack.c.l.b16 %v1347
        %v1515 = vunpack.c.l.b16 %v1348
        %v1516 = vunpack.c.l.b16 %v1349
        %v1517 = vunpack.c.l.b16 %v1350
        %v1518 = vunpack.c.l.b16 %v1351
        %v1519 = vunpack.c.l.b16 %v1352
        %v1520 = vunpack.c.l.b16 %v1353
        %v1521 = vunpack.c.l.b16 %v1354
        %v1522 = vunpack.c.l.b16 %v1355
        %v1523 = vunpack.c.l.b16 %v1356
        %v1524 = vunpack.c.l.b16 %v1357
        %v1525 = vunpack.c.l.b16 %v1358
        %v1526 = vunpack.c.l.b16 %v1359
        %v1527 = vunpack.c.l.b16 %v1360
        %v1528 = vunpack.c.l.b16 %v1361
        %v1529 = vunpack.c.l.b16 %v1362
        %v1530 = vunpack.c.l.b16 %v1363
        %v1531 = vunpack.c.l.b16 %v1364
        %v1532 = vunpack.c.l.b16 %v1365
        %v1533 = vunpack.c.l.b16 %v1366
        %v1534 = vunpack.c.l.b16 %v1367
        %v1535 = vunpack.c.l.b16 %v1368
        %v1536 = vunpack.c.l.b16 %v1369
        %v1537 = vunpack.c.l.b16 %v1370
        %v1538 = vunpack.c.l.b16 %v1371
        %v1539 = vunpack.c.l.b16 %v1372
        %v1540 = vunpack.c.l.b16 %v1373
        %v1541 = vunpack.c.l.b16 %v1374
        %v1542 = vunpack.c.l.b16 %v1375
        %v1543 = vunpack.c.l.b16 %v1376
        %v1544 = vunpack.c.l.b16 %v1377
        %v1545 = vunpack.c.l.b16 %v1378
        %v1546 = vunpack.c.l.b16 %v1379
        %v1547 = vunpack.c.l.b16 %v1380
        %v1548 = vunpack.c.l.b16 %v1381
        %v1549 = vunpack.c.l.b16 %v1382
        %v1550 = vunpack.c.l.b16 %v1383
        %v1551 = vunpack.c.l.b16 %v1384
        %v1552 = vunpack.c.l.b16 %v1385
        %v1553 = vunpack.c.l.b16 %v1386
        %v1554 = vunpack.c.l.b16 %v1387
        %v1555 = vunpack.c.l.b16 %v1388
        %v1556 = vunpack.c.l.b16 %v1389
        %v1557 = vunpack.c.l.b16 %v1390
        %v1558 = vunpack.c.l.b16 %v1391
        %v1559 = vunpack.c.l.b16 %v1392
        %v1560 = vunpack.c.l.b16 %v1393
        %v1561 = vunpack.c.l.b16 %v1394
        %v1562 = vunpack.c.l.b16 %v1395
        %v1563 = vunpack.c.l.b16 %v1396
        %v1564 = vunpack.c.l.b16 %v1397
        %v1565 = vunpack.c.l.b16 %v1398
        %v1566 = vunpack.c.l.b16 %v1399
        %v1567 = vunpack.c.l.b16 %v1400
        %v1568 = vunpack.c.l.b16 %v1401
        %v1569 = vunpack.c.l.b16 %v1402
        %v1570 = vunpack.c.l.b16 %v1403
        %v1571 = vunpack.c.l.b16 %v1404
        %v1572 = vunpack.c.l.b16 %v1405
        %v1573 = vunpack.c.l.b16 %v1406
        %v1574 = vunpack.c.l.b16 %v1407
        %v1575 = vunpack.c.l.b16 %v1408
        %v1576 = vunpack.c.l.b16 %v1409
        %v1577 = vunpack.c.l.b16 %v1410
        %v1578 = vunpack.c.l.b16 %v1411
        %v1579 = vunpack.c.l.b16 %v1412
        %v1580 = vunpack.c.l.b16 %v1413
        %v1581 = vunpack.c.l.b16 %v1414
        %v1582 = vunpack.c.l.b16 %v1415
        %v1583 = vunpack.c.l.b16 %v1416
        %v1584 = vunpack.c.l.b16 %v1417
        %v1585 = vpack.c.b16 %v1506, %v1505
        %v1586 = vpack.c.b16 %v1508, %v1507
        %v1587 = vpack.c.b16 %v1510, %v1509
        %v1588 = vpack.c.b16 %v1512, %v1511
        %v1589 = vpack.c.b16 %v1514, %v1513
        %v1590 = vpack.c.b16 %v1516, %v1515
        %v1591 = vpack.c.b16 %v1518, %v1517
        %v1592 = vpack.c.b16 %v1520, %v1519
        %v1593 = vpack.c.b16 %v1522, %v1521
        %v1594 = vpack.c.b16 %v1524, %v1523
        %v1595 = vpack.c.b16 %v1526, %v1525
        %v1596 = vpack.c.b16 %v1528, %v1527
        %v1597 = vpack.c.b16 %v1530, %v1529
        %v1598 = vpack.c.b16 %v1532, %v1531
        %v1599 = vpack.c.b16 %v1534, %v1533
        %v1600 = vpack.c.b16 %v1536, %v1535
        %v1601 = vpack.c.b16 %v1538, %v1537
        %v1602 = vpack.c.b16 %v1540, %v1539
        %v1603 = vpack.c.b16 %v1542, %v1541
        %v1604 = vpack.c.b16 %v1544, %v1543
        %v1605 = vpack.c.b16 %v1546, %v1545
        %v1606 = vpack.c.b16 %v1548, %v1547
        %v1607 = vpack.c.b16 %v1550, %v1549
        %v1608 = vpack.c.b16 %v1552, %v1551
        %v1609 = vpack.c.b16 %v1554, %v1553
        %v1610 = vpack.c.b16 %v1556, %v1555
        %v1611 = vpack.c.b16 %v1558, %v1557
        %v1612 = vpack.c.b16 %v1560, %v1559
        %v1613 = vpack.c.b16 %v1562, %v1561
        %v1614 = vpack.c.b16 %v1564, %v1563
        %v1615 = vpack.c.b16 %v1566, %v1565
        %v1616 = vpack.c.b16 %v1568, %v1567
        %v1617 = vpack.c.b16 %v1570, %v1569
        %v1618 = vpack.c.b16 %v1572, %v1571
        %v1619 = vpack.c.b16 %v1574, %v1573
        %v1620 = vpack.c.b16 %v1576, %v1575
        %v1621 = vpack.c.b16 %v1578, %v1577
        %v1622 = vpack.c.b16 %v1580, %v1579
        %v1623 = vpack.c.b16 %v1582, %v1581
        %v1624 = vpack.c.b16 %v1584, %v1583
        %1665 = vmatprep.subr.bf16.mxu0 0
        %1666 = vmatpush1.bf16.msra.mxu0 %v1585
        %1667 = vmatprep.subr.bf16.mxu0 0
        %1668 = vmatpush1.bf16.msra.mxu0 %v1586
        %1669 = vmatprep.subr.bf16.mxu0 0
        %1670 = vmatpush1.bf16.msra.mxu0 %v1587
        %1671 = vmatprep.subr.bf16.mxu0 0
        %1672 = vmatpush1.bf16.msra.mxu0 %v1588
        %1673 = vmatprep.subr.bf16.mxu0 0
        %1674 = vmatpush1.bf16.msra.mxu0 %v1589
        %1675 = vmatprep.subr.bf16.mxu0 0
        %1676 = vmatpush1.bf16.msra.mxu0 %v1590
        %1677 = vmatprep.subr.bf16.mxu0 0
        %1678 = vmatpush1.bf16.msra.mxu0 %v1591
        %1679 = vmatprep.subr.bf16.mxu0 0
        %1680 = vmatpush1.bf16.msra.mxu0 %v1592
        %1681 = vmatprep.subr.bf16.mxu0 0
        %1682 = vmatpush1.bf16.msra.mxu0 %v1593
        %1683 = vmatprep.subr.bf16.mxu0 0
        %1684 = vmatpush1.bf16.msra.mxu0 %v1594
        %1685 = vmatprep.subr.bf16.mxu0 0
        %1686 = vmatpush1.bf16.msra.mxu0 %v1595
        %1687 = vmatprep.subr.bf16.mxu0 0
        %1688 = vmatpush1.bf16.msra.mxu0 %v1596
        %1689 = vmatprep.subr.bf16.mxu0 0
        %1690 = vmatpush1.bf16.msra.mxu0 %v1597
        %1691 = vmatprep.subr.bf16.mxu0 0
        %1692 = vmatpush1.bf16.msra.mxu0 %v1598
        %1693 = vmatprep.subr.bf16.mxu0 0
        %1694 = vmatpush1.bf16.msra.mxu0 %v1599
        %1695 = vmatprep.subr.bf16.mxu0 0
        %1696 = vmatpush1.bf16.msra.mxu0 %v1600
        %1697 = vmatprep.mubr.bf16.mxu0 %v862
        %1698 = vmatmul.mubr.bf16.gmra.mrb[0].mxu0 %v660
        %v1699 = vpop.f32.mrb[0].mxu0
        %v1700 = vadd.f32 %v1423, %v1699
        %v1701 = vpop.f32.mrb[0].mxu0
        %v1702 = vpop.f32.mrb[0].mxu0
        %v1703 = vadd.f32 %v1423, %v1702
        %v1704 = vpop.f32.mrb[0].mxu0
        %1705 = vmatprep.mubr.bf16.mxu0 %v863
        %1706 = vmatmul.mubr.bf16.gmra.mrb[0].mxu0 %v661
        %v1707 = vpop.f32.mrb[0].mxu0
        %v1708 = vadd.f32 %v1423, %v1707
        %v1709 = vpop.f32.mrb[0].mxu0
        %v1710 = vpop.f32.mrb[0].mxu0
        %v1711 = vadd.f32 %v1423, %v1710
        %v1712 = vpop.f32.mrb[0].mxu0
        %1713 = vmatprep.mubr.bf16.mxu0 %v864
        %1714 = vmatmul.mubr.bf16.gmra.mrb[0].mxu0 %v662
        %v1715 = vpop.f32.mrb[0].mxu0
        %v1716 = vadd.f32 %v1423, %v1715
        %v1717 = vpop.f32.mrb[0].mxu0
        %v1718 = vpop.f32.mrb[0].mxu0
        %v1719 = vadd.f32 %v1423, %v1718
        %v1720 = vpop.f32.mrb[0].mxu0
        %1721 = vmatprep.mubr.bf16.mxu0 %v865
        %1722 = vmatmul.mubr.bf16.gmra.mrb[0].mxu0 %v663
        %v1723 = vpop.f32.mrb[0].mxu0
        %v1724 = vadd.f32 %v1423, %v1723
        %v1725 = vpop.f32.mrb[0].mxu0
        %v1726 = vpop.f32.mrb[0].mxu0
        %v1727 = vadd.f32 %v1423, %v1726
        %v1728 = vpop.f32.mrb[0].mxu0
        %1729 = vmatprep.mubr.bf16.mxu0 %v866
        %1730 = vmatmul.mubr.bf16.gmra.mrb[0].mxu0 %v664
        %v1731 = vpop.f32.mrb[0].mxu0
        %v1732 = vadd.f32 %v1423, %v1731
        %v1733 = vpop.f32.mrb[0].mxu0
        %v1734 = vpop.f32.mrb[0].mxu0
        %v1735 = vadd.f32 %v1423, %v1734
        %v1736 = vpop.f32.mrb[0].mxu0
        %1737 = vmatprep.mubr.bf16.mxu0 %v867
        %1738 = vmatmul.mubr.bf16.gmra.mrb[0].mxu0 %v665
        %v1739 = vpop.f32.mrb[0].mxu0
        %v1740 = vadd.f32 %v1423, %v1739
        %v1741 = vpop.f32.mrb[0].mxu0
        %v1742 = vpop.f32.mrb[0].mxu0
        %v1743 = vadd.f32 %v1423, %v1742
        %v1744 = vpop.f32.mrb[0].mxu0
        %1745 = vmatprep.mubr.bf16.mxu0 %v868
        %1746 = vmatmul.mubr.bf16.gmra.mrb[0].mxu0 %v666
        %v1747 = vpop.f32.mrb[0].mxu0
        %v1748 = vadd.f32 %v1423, %v1747
        %v1749 = vpop.f32.mrb[0].mxu0
        %v1750 = vpop.f32.mrb[0].mxu0
        %v1751 = vadd.f32 %v1423, %v1750
        %v1752 = vpop.f32.mrb[0].mxu0
        %1753 = vmatprep.mubr.bf16.mxu0 %v869
        %1754 = vmatmul.mubr.bf16.gmra.mrb[0].mxu0 %v667
        %v1755 = vpop.f32.mrb[0].mxu0
        %v1756 = vadd.f32 %v1423, %v1755
        %v1757 = vpop.f32.mrb[0].mxu0
        %v1758 = vpop.f32.mrb[0].mxu0
        %v1759 = vadd.f32 %v1423, %v1758
        %v1760 = vpop.f32.mrb[0].mxu0
        %1761 = vdwg.mxu0
        %1762 = vmatprep.subr.bf16.mxu0 0
        %1763 = vmatpush1.bf16.msra.mxu0 %v1601
        %1764 = vmatprep.subr.bf16.mxu0 0
        %1765 = vmatpush1.bf16.msra.mxu0 %v1602
        %1766 = vmatprep.subr.bf16.mxu0 0
        %1767 = vmatpush1.bf16.msra.mxu0 %v1603
        %1768 = vmatprep.subr.bf16.mxu0 0
        %1769 = vmatpush1.bf16.msra.mxu0 %v1604
        %1770 = vmatprep.subr.bf16.mxu0 0
        %1771 = vmatpush1.bf16.msra.mxu0 %v1605
        %1772 = vmatprep.subr.bf16.mxu0 0
        %1773 = vmatpush1.bf16.msra.mxu0 %v1606
        %1774 = vmatprep.subr.bf16.mxu0 0
        %1775 = vmatpush1.bf16.msra.mxu0 %v1607
        %1776 = vmatprep.subr.bf16.mxu0 0
        %1777 = vmatpush1.bf16.msra.mxu0 %v1608
        %1778 = vmatprep.subr.bf16.mxu0 0
        %1779 = vmatpush1.bf16.msra.mxu0 %v1609
        %1780 = vmatprep.subr.bf16.mxu0 0
        %1781 = vmatpush1.bf16.msra.mxu0 %v1610
        %1782 = vmatprep.subr.bf16.mxu0 0
        %1783 = vmatpush1.bf16.msra.mxu0 %v1611
        %1784 = vmatprep.subr.bf16.mxu0 0
        %1785 = vmatpush1.bf16.msra.mxu0 %v1612
        %1786 = vmatprep.subr.bf16.mxu0 0
        %1787 = vmatpush1.bf16.msra.mxu0 %v1613
        %1788 = vmatprep.subr.bf16.mxu0 0
        %1789 = vmatpush1.bf16.msra.mxu0 %v1614
        %1790 = vmatprep.subr.bf16.mxu0 0
        %1791 = vmatpush1.bf16.msra.mxu0 %v1615
        %1792 = vmatprep.subr.bf16.mxu0 0
        %1793 = vmatpush1.bf16.msra.mxu0 %v1616
        %1794 = vmatprep.mubr.bf16.mxu0 %v1266
        %1795 = vmatmul.mubr.bf16.gmra.mrb[0].mxu0 %v1064
        %v1796 = vpop.f32.mrb[0].mxu0
        %v1797 = vadd.f32 %v1700, %v1796
        %v1798 = vpop.f32.mrb[0].mxu0
        %v1799 = vpop.f32.mrb[0].mxu0
        %v1800 = vadd.f32 %v1703, %v1799
        %v1801 = vpop.f32.mrb[0].mxu0
        %1802 = vmatprep.mubr.bf16.mxu0 %v1267
        %1803 = vmatmul.mubr.bf16.gmra.mrb[0].mxu0 %v1065
        %v1804 = vpop.f32.mrb[0].mxu0
        %v1805 = vadd.f32 %v1708, %v1804
        %v1806 = vpop.f32.mrb[0].mxu0
        %v1807 = vpop.f32.mrb[0].mxu0
        %v1808 = vadd.f32 %v1711, %v1807
        %v1809 = vpop.f32.mrb[0].mxu0
        %1810 = vmatprep.mubr.bf16.mxu0 %v1268
        %1811 = vmatmul.mubr.bf16.gmra.mrb[0].mxu0 %v1066
        %v1812 = vpop.f32.mrb[0].mxu0
        %v1813 = vadd.f32 %v1716, %v1812
        %v1814 = vpop.f32.mrb[0].mxu0
        %v1815 = vpop.f32.mrb[0].mxu0
        %v1816 = vadd.f32 %v1719, %v1815
        %v1817 = vpop.f32.mrb[0].mxu0
        %1818 = vmatprep.mubr.bf16.mxu0 %v1269
        %1819 = vmatmul.mubr.bf16.gmra.mrb[0].mxu0 %v1067
        %v1820 = vpop.f32.mrb[0].mxu0
        %v1821 = vadd.f32 %v1724, %v1820
        %v1822 = vpop.f32.mrb[0].mxu0
        %v1823 = vpop.f32.mrb[0].mxu0
        %v1824 = vadd.f32 %v1727, %v1823
        %v1825 = vpop.f32.mrb[0].mxu0
        %1826 = vmatprep.mubr.bf16.mxu0 %v1270
        %1827 = vmatmul.mubr.bf16.gmra.mrb[0].mxu0 %v1068
        %v1828 = vpop.f32.mrb[0].mxu0
        %v1829 = vadd.f32 %v1732, %v1828
        %v1830 = vpop.f32.mrb[0].mxu0
        %v1831 = vpop.f32.mrb[0].mxu0
        %v1832 = vadd.f32 %v1735, %v1831
        %v1833 = vpop.f32.mrb[0].mxu0
        %1834 = vmatprep.mubr.bf16.mxu0 %v1271
        %1835 = vmatmul.mubr.bf16.gmra.mrb[0].mxu0 %v1069
        %v1836 = vpop.f32.mrb[0].mxu0
        %v1837 = vadd.f32 %v1740, %v1836
        %v1838 = vpop.f32.mrb[0].mxu0
        %v1839 = vpop.f32.mrb[0].mxu0
        %v1840 = vadd.f32 %v1743, %v1839
        %v1841 = vpop.f32.mrb[0].mxu0
        %1842 = vmatprep.mubr.bf16.mxu0 %v1272
        %1843 = vmatmul.mubr.bf16.gmra.mrb[0].mxu0 %v1070
        %v1844 = vpop.f32.mrb[0].mxu0
        %v1845 = vadd.f32 %v1748, %v1844
        %v1846 = vpop.f32.mrb[0].mxu0
        %v1847 = vpop.f32.mrb[0].mxu0
        %v1848 = vadd.f32 %v1751, %v1847
        %v1849 = vpop.f32.mrb[0].mxu0
        %1850 = vmatprep.mubr.bf16.mxu0 %v1273
        %1851 = vmatmul.mubr.bf16.gmra.mrb[0].mxu0 %v1071
        %v1852 = vpop.f32.mrb[0].mxu0
        %v1853 = vadd.f32 %v1756, %v1852
        %v1854 = vpop.f32.mrb[0].mxu0
        %v1855 = vpop.f32.mrb[0].mxu0
        %v1856 = vadd.f32 %v1759, %v1855
        %v1857 = vpop.f32.mrb[0].mxu0
        %1858 = vdwg.mxu0
        %1859 = vmatprep.subr.bf16.mxu0 0
        %1860 = vmatpush1.bf16.msra.mxu0 %v1617
        %1861 = vmatprep.subr.bf16.mxu0 0
        %1862 = vmatpush1.bf16.msra.mxu0 %v1618
        %1863 = vmatprep.subr.bf16.mxu0 0
        %1864 = vmatpush1.bf16.msra.mxu0 %v1619
        %1865 = vmatprep.subr.bf16.mxu0 0
        %1866 = vmatpush1.bf16.msra.mxu0 %v1620
        %1867 = vmatprep.subr.bf16.mxu0 0
        %1868 = vmatpush1.bf16.msra.mxu0 %v1621
        %1869 = vmatprep.subr.bf16.mxu0 0
        %1870 = vmatpush1.bf16.msra.mxu0 %v1622
        %1871 = vmatprep.subr.bf16.mxu0 0
        %1872 = vmatpush1.bf16.msra.mxu0 %v1623
        %1873 = vmatprep.subr.bf16.mxu0 0
        %1874 = vmatpush1.bf16.msra.mxu0 %v1624
        %1875 = vmatprep.subr.bf16.mxu0 0
        %1876 = vmatpush1.bf16.msra.mxu0 0
        %1877 = vmatprep.subr.bf16.mxu0 0
        %1878 = vmatpush1.bf16.msra.mxu0 0
        %1879 = vmatprep.subr.bf16.mxu0 0
        %1880 = vmatpush1.bf16.msra.mxu0 0
        %1881 = vmatprep.subr.bf16.mxu0 0
        %1882 = vmatpush1.bf16.msra.mxu0 0
        %1883 = vmatprep.subr.bf16.mxu0 0
        %1884 = vmatpush1.bf16.msra.mxu0 0
        %1885 = vmatprep.subr.bf16.mxu0 0
        %1886 = vmatpush1.bf16.msra.mxu0 0
        %1887 = vmatprep.subr.bf16.mxu0 0
        %1888 = vmatpush1.bf16.msra.mxu0 0
        %1889 = vmatprep.subr.bf16.mxu0 0
        %1890 = vmatpush1.bf16.msra.mxu0 0
        %1891 = vmatprep.mubr.bf16.mxu0 0
        %1892 = vmatmul.mubr.bf16.gmra.mrb[0].mxu0 %v1322
        %v1893 = vpop.f32.mrb[0].mxu0
        %v1894 = vadd.f32 %v1797, %v1893
        %v1895 = vpop.f32.mrb[0].mxu0
        %v1896 = vpop.f32.mrb[0].mxu0
        %v1897 = vadd.f32 %v1800, %v1896
        %v1898 = vpop.f32.mrb[0].mxu0
        %1899 = vmatprep.mubr.bf16.mxu0 0
        %1900 = vmatmul.mubr.bf16.gmra.mrb[0].mxu0 %v1323
        %v1901 = vpop.f32.mrb[0].mxu0
        %v1902 = vadd.f32 %v1805, %v1901
        %v1903 = vpop.f32.mrb[0].mxu0
        %v1904 = vpop.f32.mrb[0].mxu0
        %v1905 = vadd.f32 %v1808, %v1904
        %v1906 = vpop.f32.mrb[0].mxu0
        %1907 = vmatprep.mubr.bf16.mxu0 0
        %1908 = vmatmul.mubr.bf16.gmra.mrb[0].mxu0 %v1324
        %v1909 = vpop.f32.mrb[0].mxu0
        %v1910 = vadd.f32 %v1813, %v1909
        %v1911 = vpop.f32.mrb[0].mxu0
        %v1912 = vpop.f32.mrb[0].mxu0
        %v1913 = vadd.f32 %v1816, %v1912
        %v1914 = vpop.f32.mrb[0].mxu0
        %1915 = vmatprep.mubr.bf16.mxu0 0
        %1916 = vmatmul.mubr.bf16.gmra.mrb[0].mxu0 %v1325
        %v1917 = vpop.f32.mrb[0].mxu0
        %v1918 = vadd.f32 %v1821, %v1917
        %v1919 = vpop.f32.mrb[0].mxu0
        %v1920 = vpop.f32.mrb[0].mxu0
        %v1921 = vadd.f32 %v1824, %v1920
        %v1922 = vpop.f32.mrb[0].mxu0
        %1923 = vmatprep.mubr.bf16.mxu0 0
        %1924 = vmatmul.mubr.bf16.gmra.mrb[0].mxu0 %v1326
        %v1925 = vpop.f32.mrb[0].mxu0
        %v1926 = vadd.f32 %v1829, %v1925
        %v1927 = vpop.f32.mrb[0].mxu0
        %v1928 = vpop.f32.mrb[0].mxu0
        %v1929 = vadd.f32 %v1832, %v1928
        %v1930 = vpop.f32.mrb[0].mxu0
        %1931 = vmatprep.mubr.bf16.mxu0 0
        %1932 = vmatmul.mubr.bf16.gmra.mrb[0].mxu0 %v1327
        %v1933 = vpop.f32.mrb[0].mxu0
        %v1934 = vadd.f32 %v1837, %v1933
        %v1935 = vpop.f32.mrb[0].mxu0
        %v1936 = vpop.f32.mrb[0].mxu0
        %v1937 = vadd.f32 %v1840, %v1936
        %v1938 = vpop.f32.mrb[0].mxu0
        %1939 = vmatprep.mubr.bf16.mxu0 0
        %1940 = vmatmul.mubr.bf16.gmra.mrb[0].mxu0 %v1328
        %v1941 = vpop.f32.mrb[0].mxu0
        %v1942 = vadd.f32 %v1845, %v1941
        %v1943 = vpop.f32.mrb[0].mxu0
        %v1944 = vpop.f32.mrb[0].mxu0
        %v1945 = vadd.f32 %v1848, %v1944
        %v1946 = vpop.f32.mrb[0].mxu0
        %1947 = vmatprep.mubr.bf16.mxu0 0
        %1948 = vmatmul.mubr.bf16.gmra.mrb[0].mxu0 %v1329
        %v1949 = vpop.f32.mrb[0].mxu0
        %v1950 = vadd.f32 %v1853, %v1949
        %v1951 = vpop.f32.mrb[0].mxu0
        %v1952 = vpop.f32.mrb[0].mxu0
        %v1953 = vadd.f32 %v1856, %v1952
        %v1954 = vpop.f32.mrb[0].mxu0
        %1955 = vdwg.mxu0
        %v1956 = vmax.f32 %v1894, 0.0
        %v1957 = vmax.f32 %v1897, 0.0
        %v1958 = vmax.f32 %v1902, 0.0
        %v1959 = vmax.f32 %v1905, 0.0
        %v1960 = vmax.f32 %v1910, 0.0
        %v1961 = vmax.f32 %v1913, 0.0
        %v1962 = vmax.f32 %v1918, 0.0
        %v1963 = vmax.f32 %v1921, 0.0
        %v1964 = vmax.f32 %v1926, 0.0
        %v1965 = vmax.f32 %v1929, 0.0
        %v1966 = vmax.f32 %v1934, 0.0
        %v1967 = vmax.f32 %v1937, 0.0
        %v1968 = vmax.f32 %v1942, 0.0
        %v1969 = vmax.f32 %v1945, 0.0
        %v1970 = vmax.f32 %v1950, 0.0
        %v1971 = vmax.f32 %v1953, 0.0
        %v1972 = vpack.c.bf16 %v1957, %v1956
        %v1973 = vpack.c.bf16 %v1959, %v1958
        %v1974 = vpack.c.bf16 %v1961, %v1960
        %v1975 = vpack.c.bf16 %v1963, %v1962
        %v1976 = vpack.c.bf16 %v1965, %v1964
        %v1977 = vpack.c.bf16 %v1967, %v1966
        %v1978 = vpack.c.bf16 %v1969, %v1968
        %v1979 = vpack.c.bf16 %v1971, %v1970
        %v1988 = vunpack.c.l.b16 %v1972
        %v1989 = vunpack.c.h.b16 %v1972
        %v1990 = vunpack.c.l.b16 %v1973
        %v1991 = vunpack.c.h.b16 %v1973
        %v1992 = vunpack.c.l.b16 %v1974
        %v1993 = vunpack.c.h.b16 %v1974
        %v1994 = vunpack.c.l.b16 %v1975
        %v1995 = vunpack.c.h.b16 %v1975
        %v1996 = vunpack.c.l.b16 %v1976
        %v1997 = vunpack.c.h.b16 %v1976
        %v1998 = vunpack.c.l.b16 %v1977
        %v1999 = vunpack.c.h.b16 %v1977
        %v2000 = vunpack.c.l.b16 %v1978
        %v2001 = vunpack.c.h.b16 %v1978
        %v2002 = vunpack.c.l.b16 %v1979
        %v2003 = vunpack.c.h.b16 %v1979
        %v2004 = vpack.c.b16 %v1988, %v1988
        %v2005 = vpack.c.b16 %v1989, %v1989
        %v2006 = vpack.c.b16 %v1990, %v1990
        %v2007 = vpack.c.b16 %v1991, %v1991
        %v2008 = vpack.c.b16 %v1992, %v1992
        %v2009 = vpack.c.b16 %v1993, %v1993
        %v2010 = vpack.c.b16 %v1994, %v1994
        %v2011 = vpack.c.b16 %v1995, %v1995
        %v2012 = vpack.c.b16 %v1996, %v1996
        %v2013 = vpack.c.b16 %v1997, %v1997
        %v2014 = vpack.c.b16 %v1998, %v1998
        %v2015 = vpack.c.b16 %v1999, %v1999
        %v2016 = vpack.c.b16 %v2000, %v2000
        %v2017 = vpack.c.b16 %v2001, %v2001
        %v2018 = vpack.c.b16 %v2002, %v2002
        %v2019 = vpack.c.b16 %v2003, %v2003
        %2036 = vst [vmem:[%s334] sm:$0xf] %v2004
        %2037 = vst [vmem:[%s334 + $0x4] sm:$0xf] %v2005
        %2038 = vst [vmem:[%s334 + $0x8] sm:$0xf] %v2006
        %2039 = vst [vmem:[%s334 + $0xc] sm:$0xf] %v2007
        %2040 = vst [vmem:[%s334 + $0x10] sm:$0xf] %v2008
        %2041 = vst [vmem:[%s334 + $0x14] sm:$0xf] %v2009
        %2042 = vst [vmem:[%s334 + $0x18] sm:$0xf] %v2010
        %2043 = vst [vmem:[%s334 + $0x1c] sm:$0xf] %v2011
        %2044 = vst [vmem:[%s334 + $0x20] sm:$0xf] %v2012
        %2045 = vst [vmem:[%s334 + $0x24] sm:$0xf] %v2013
        %2046 = vst [vmem:[%s334 + $0x28] sm:$0xf] %v2014
        %2047 = vst [vmem:[%s334 + $0x2c] sm:$0xf] %v2015
        %2048 = vst [vmem:[%s334 + $0x30] sm:$0xf] %v2016
        %2049 = vst [vmem:[%s334 + $0x34] sm:$0xf] %v2017
        %2050 = vst [vmem:[%s334 + $0x38] sm:$0xf] %v2018
        %2051 = vst [vmem:[%s334 + $0x3c] sm:$0xf] %v2019
        %s2052 = sand.u32 %s146, 1
        %s2053 = scalar_lea.sflag [#allocation4], %s2052
        %s2054 = sand.u32 %s146, 1
        %s2055 = smul.addr %s2054, 64
        %s2056 = scalar_lea.vmem [#allocation9], %s2055
        // Predicated region
        $region57: #{tpu_custom_call.1} parent=39 // pred_check
          %p2057 = pneg %p156
        $region58: #{tpu_custom_call.1} parent=39 // pred_check_branch
          %2059 = sbr.rel (%p2057) target = $region60
        $region59: #{tpu_custom_call.1} parent=39 // pred_region
          %s2060 = smul.u32 16, %s23
          %s2062 = ssub.s32 1024, 1024
          %2063 = vsyncadd %s2053, %s2062
          %s2064 = smul.addr %s2060, 64
          %s2065 = scalar_lea.hbm %s5, %s2064
          %s2066 = sshll.u32 %s2056, 4
          %s2067 = int_to_ptr.vmem [resolvable:$true] %s2066
          %2072 = dma.vmem_to_hbm [thread:$0]  %s2067, 1024, %s2065, %s2053, 64, 64, 4
        $region60: #{tpu_custom_call.1} parent=39 // pred_fallthru
          _
      $region40: #{tpu_custom_call.1} parent=5 // pred_fallthru
        _
      %p2073 = scmp.le.s32.totalorder 2, %s18
      // Predicated region
      $region61: #{tpu_custom_call.1} parent=5 // pred_check
        %p2074 = pneg %p2073
      $region62: #{tpu_custom_call.1} parent=5 // pred_check_branch
        %2076 = sbr.rel (%p2074) target = $region64
      $region63: #{tpu_custom_call.1} parent=5 // pred_region
        %s2077 = ssub.s32 %s18, 2
        // Predicated region
        $region65: #{tpu_custom_call.1} parent=63 // pred_check
          %p2078 = pneg %p162
        $region66: #{tpu_custom_call.1} parent=63 // pred_check_branch
          %2080 = sbr.rel (%p2078) target = $region68
        $region67: #{tpu_custom_call.1} parent=63 // pred_region
          %s2081 = sand.u32 %s147, 1
          %s2082 = scalar_lea.sflag [#allocation4], %s2081
          %s2083 = sand.u32 %s147, 1
          %s2084 = smul.addr %s2083, 64
          %s2085 = scalar_lea.vmem [#allocation9], %s2084
          %2086 = dma.done %s2082, 1024
        $region68: #{tpu_custom_call.1} parent=63 // pred_fallthru
          _
      $region64: #{tpu_custom_call.1} parent=5 // pred_fallthru
        _
    $region6: #{tpu_custom_call.1} parent=1 // loop_footer
      %s22 = sadd.s32 1, %s18
    $region7: #{tpu_custom_call.1} parent=1 // loop_footer_branch
      %17 = sbr.rel target = $region3
    $region8: #{tpu_custom_call.1} parent=1 // loop_exit
      _
    %2087 = vsyncpa [#allocation3], 1
    %s2088 = scalar_lea.sflag [#allocation3], 1
    %2089 = vsyncpa %s2088, 1
    %2090 = vsyncpa [#allocation6], 1
    %2091 = vsyncpa [#allocation4], 1
    %s2092 = scalar_lea.sflag [#allocation4], 1
    %2093 = vsyncpa %s2092, 1

</llo_original>
